<compile_context>
chip_gen: v5e
topology: v5e:2x2
jax: 0.10.0
libtpu: 0.0.40
codegen_flags: <defaults>
</compile_context>

<pallas_src>
import functools

import jax
import jax.numpy as jnp
import numpy as np
from jax import lax
from jax.experimental import pallas as pl
from jax.experimental.pallas import tpu as pltpu


# ------------------------------ small helpers ------------------------------ #
def _round_up(x, m):
    return (x + m - 1) // m * m


def _pow2_steps(n):
    steps, k = [], 1
    while k < n:
        steps.append(k)
        k <<= 1
    return steps


def _approx_recip(x):
    """EUP approximate reciprocal + one Newton-Raphson step (2 VALU ops)."""
    r0 = pl.reciprocal(x, approx=True)
    return r0 * (2.0 - x * r0)


def _largest_divisor(c, cap, fits):
    best = 1
    for d in range(1, c + 1):
        if c % d == 0 and d <= cap and fits(d):
            best = d
    return best


# ----------------------- clamped 2-D box-sum operator ---------------------- #
def _make_box2d(*, h, w, r, h_valid, w_valid, row_off):
    """Build a clamped (2r+1)x(2r+1) box-*sum* operator for (c, h, w) slabs.

    The sum at (i, j) runs over sources whose *global* coordinates
    (i + row_off + di, j + dj), |di|,|dj| <= r, lie inside
    [0, h_valid) x [0, w_valid) -- exactly the PyTorch cumsum/diff BoxFilter
    with the window clamped at the true image border.  Positions whose own
    global coordinate is outside the valid image produce don't-care (finite)
    values; callers never consume them.

    Internally each (c, h, w) operand is viewed as (c*h, w) (a free view when
    h % 8 == 0) so every roll is a plain 2-D sublane/lane rotation.  Per-axis
    masks are built ONCE here and shared by every operand and by both
    filtering phases.  Two schemes per axis, chosen by roll count:
      * shifted adds: 2r rolls
      * fwd+bwd masked prefix scans + two offset differences:
        ~2*log2(extent)+2 rolls (used when r is large).
    """
    f32 = jnp.float32
    steps_w = _pow2_steps(w_valid)
    steps_h = _pow2_steps(h)
    use_prefix_w = r > 0 and 2 * r > 2 * len(steps_w) + 2
    use_prefix_h = r > 0 and 2 * r > 2 * len(steps_h) + 2
    h_all_valid = isinstance(row_off, int) and row_off == 0 and h_valid == h
    w_all_valid = w_valid == w

    # ---- lane (W) axis masks, shape (1, w); shared by all operands ----
    wm = {}
    if r > 0:
        col = lax.broadcasted_iota(jnp.int32, (1, w), 1)
        if use_prefix_w:
            if not w_all_valid:
                wm["valid"] = (col < w_valid).astype(f32)
            wm["fwd"] = [(col >= k).astype(f32) for k in steps_w]
            wm["bwd"] = [(col <= w_valid - 1 - k).astype(f32) for k in steps_w]
            wm["lo"] = (col >= r + 1).astype(f32)
            wm["hi"] = (col <= w_valid - 1 - (r + 1)).astype(f32)
        else:
            wm["plus"] = [(col <= w_valid - 1 - d).astype(f32)
                          for d in range(1, r + 1)]
            wm["minus"] = [(col >= d).astype(f32) for d in range(1, r + 1)]

    # ---- sublane (H) axis masks, shape (rows, 1), built lazily per size ----
    hcache = {}

    def hmasks(rows):
        if rows in hcache:
            return hcache[rows]
        base = lax.broadcasted_iota(jnp.int32, (h, 1), 0)
        if rows == h:
            loc = base
        else:
            loc = jnp.broadcast_to(base, (rows // h, h, 1)).reshape(rows, 1)
        g = loc + row_off
        m = {}
        if use_prefix_h:
            if not h_all_valid:
                m["valid"] = ((g >= 0) & (g <= h_valid - 1)).astype(f32)
            m["fwd"] = [(loc >= k).astype(f32) for k in steps_h]
            m["bwd"] = [(loc <= h - 1 - k).astype(f32) for k in steps_h]
            m["lo"] = (loc >= r + 1).astype(f32)
            m["hi"] = (loc <= h - 1 - (r + 1)).astype(f32)
        else:
            plus, minus = [], []
            for d in range(1, r + 1):
                up = (g <= h_valid - 1 - d)
                dn = (g >= d)
                if not h_all_valid:
                    up = up & (loc <= h - 1 - d)   # same-slab / no-wrap
                    dn = dn & (loc >= d)
                plus.append(up.astype(f32))
                minus.append(dn.astype(f32))
            m["plus"], m["minus"] = plus, minus
        hcache[rows] = m
        return m

    def _box_w(t2):
        if r == 0:
            return t2
        if use_prefix_w:
            tm = t2 * wm["valid"] if "valid" in wm else t2
            p = tm
            for k, mk in zip(steps_w, wm["fwd"]):
                p = p + mk * pltpu.roll(p, k, 1)
            q = tm
            for k, mk in zip(steps_w, wm["bwd"]):
                q = q + mk * pltpu.roll(q, w - k, 1)
            a = p - wm["lo"] * pltpu.roll(p, r + 1, 1)      # sum over [j-r, j]
            b = q - wm["hi"] * pltpu.roll(q, w - (r + 1), 1)  # sum over [j, j+r]
            return a + b - tm
        acc = t2
        for d in range(1, r + 1):
            acc = acc + wm["plus"][d - 1] * pltpu.roll(t2, w - d, 1)
            acc = acc + wm["minus"][d - 1] * pltpu.roll(t2, d, 1)
        return acc

    def _box_h(t2):
        if r == 0:
            return t2
        rows = t2.shape[0]
        m = hmasks(rows)
        if use_prefix_h:
            tm = t2 * m["valid"] if "valid" in m else t2
            p = tm
            for k, mk in zip(steps_h, m["fwd"]):
                p = p + mk * pltpu.roll(p, k, 0)
            q = tm
            for k, mk in zip(steps_h, m["bwd"]):
                q = q + mk * pltpu.roll(q, rows - k, 0)
            a = p - m["lo"] * pltpu.roll(p, r + 1, 0)
            b = q - m["hi"] * pltpu.roll(q, rows - (r + 1), 0)
            return a + b - tm
        acc = t2
        for d in range(1, r + 1):
            acc = acc + m["plus"][d - 1] * pltpu.roll(t2, rows - d, 0)
            acc = acc + m["minus"][d - 1] * pltpu.roll(t2, d, 0)
        return acc

    def box2d(ops):
        """ops: list of (c_i, h, w) f32 arrays -> list of clamped box sums."""
        outs = []
        for t in ops:
            ci = t.shape[0]
            t2 = t.reshape(ci * h, w)            # free view when h % 8 == 0
            outs.append(_box_h(_box_w(t2)).reshape(ci, h, w))
        return outs

    return box2d


# ------------------------------ shared GF core ------------------------------ #
def _gf_core(x, y, inv_n, box2d, eps):
    """x: (c,h,w) f32; y: (cy,h,w) f32, cy in {1,c}; inv_n: (h,w) f32.

    Returns mean_A * x + mean_b.  No operand is replicated: a 1-channel guide
    is boxed once (1 slab, not c) and only broadcast in the elementwise math;
    inv_n broadcasts onto the 3-D view.
    """
    xy = x * y
    xx = x * x
    b_x, b_xx, b_xy, b_y = box2d([x, xx, xy, y])
    mean_x = b_x * inv_n
    mean_y = b_y * inv_n
    cov_xy = b_xy * inv_n - mean_x * mean_y
    var_x = b_xx * inv_n - mean_x * mean_x
    a = cov_xy * _approx_recip(var_x + eps)
    b = mean_y - a * mean_x
    b_a, b_b = box2d([a, b])
    return (b_a * inv_n) * x + (b_b * inv_n)


# ------------------------------ Pallas kernels ------------------------------ #
def _gf_whole_kernel(x_ref, y_ref, invn_ref, out_ref, *, r, eps, h, w_arr, w_valid):
    """Path A: whole image height per grid step (grid = (N, C/c_block))."""
    x = x_ref[...].astype(jnp.float32)
    y = y_ref[...].astype(jnp.float32)
    inv_n = invn_ref[...]
    box2d = _make_box2d(h=h, w=w_arr, r=r, h_valid=h, w_valid=w_valid, row_off=0)
    out = _gf_core(x, y, inv_n, box2d, eps)
    out_ref[...] = out.astype(out_ref.dtype)


def _gf_htile_kernel(x_hbm, y_hbm, out_ref, xwin, ywin, sem, *, r, eps,
                     h_true, h_tile, h_win, w_arr, w_valid, c_block, c_y):
    """Path B: H-tiled with a 2r-row halo; inputs stay in HBM (pl.ANY)."""
    b = pl.program_id(0)
    cb = pl.program_id(1)
    t = pl.program_id(2)

    pad_top = 2 * r
    ws = pl.multiple_of(t * h_tile, h_tile)   # window start in host-padded rows
    row_off = t * h_tile - pad_top            # original row of window-local row 0
    c0 = pl.multiple_of(cb * c_block, c_block)

    cpx = pltpu.make_async_copy(
        x_hbm.at[pl.ds(b, 1), pl.ds(c0, c_block), pl.ds(ws, h_win), :],
        xwin, sem.at[0])
    y0 = 0 if c_y == 1 else c0
    cyb = 1 if c_y == 1 else c_block
    cpy = pltpu.make_async_copy(
        y_hbm.at[pl.ds(b, 1), pl.ds(y0, cyb), pl.ds(ws, h_win), :],
        ywin, sem.at[1])
    cpx.start()
    cpy.start()
    cpx.wait()
    cpy.wait()
    # TODO(synk): double-buffer these window DMAs across grid steps so the
    # HBM fetch overlaps the (vector-bound) compute of the previous window.

    x = xwin[0].astype(jnp.float32)
    y = ywin[0].astype(jnp.float32)

    # 1/N from the global clamped window counts (clamped >= 1 so halo/pad rows
    # stay finite; their outputs are never stored).
    gr = lax.broadcasted_iota(jnp.int32, (h_win, 1), 0) + row_off
    cnt_h = jnp.maximum(
        jnp.minimum(gr + r, h_true - 1) - jnp.maximum(gr - r, 0) + 1, 1)
    gc = lax.broadcasted_iota(jnp.int32, (1, w_arr), 1)
    cnt_w = jnp.maximum(
        jnp.minimum(gc + r, w_valid - 1) - jnp.maximum(gc - r, 0) + 1, 1)
    inv_n = 1.0 / (cnt_h * cnt_w).astype(jnp.float32)

    box2d = _make_box2d(h=h_win, w=w_arr, r=r, h_valid=h_true,
                        w_valid=w_valid, row_off=row_off)
    out = _gf_core(x, y, inv_n, box2d, eps)
    out_ref[...] = out[:, pad_top:pad_top + h_tile, :].astype(out_ref.dtype)


# --------------------------------- wrapper ---------------------------------- #
def guided_filter(x, y, r, eps=1e-8, c_block=None, h_tile=None):
    """Pallas GuidedFilter forward.  x: (N, C, H, W), y: (N, 1 or C, H, W)."""
    n, c, h, w = x.shape
    ny, cy, hy, wy = y.shape
    assert n == ny
    assert cy == 1 or cy == c
    assert h == hy and w == wy
    assert h > 2 * r + 1 and w > 2 * r + 1
    r = int(r)

    w_pad = _round_up(w, 128)                  # lane-dense stores

    # generation-aware VMEM budgets (v7x: 64 MiB, v5e/v6e: 128 MiB)
    try:
        vmem_cap = int(pltpu.get_tpu_info().vmem_capacity_bytes)
    except Exception:
        vmem_cap = 64 * 1024 * 1024
    vmem_limit = min(vmem_cap * 5 // 8, 100 * 1024 * 1024)
    step_budget = vmem_limit // 2
    live = 26  # ~live f32 slabs per channel-row, incl. double-buffered IO tiles

    def fits(cb, rows):
        return live * cb * rows * w_pad * 4 <= step_budget

    if h_tile is None and fits(1, h):
        # ------------- path A: whole image height per grid step -------------
        if c_block is None:
            cap = max(c // 2, 1) if (n == 1 and c > 1) else c  # >=2 programs (v7x)
            c_block = _largest_divisor(c, cap, lambda d: fits(d, h))
        assert c % c_block == 0

        xp = x if w_pad == w else jnp.pad(x, ((0, 0), (0, 0), (0, 0), (0, w_pad - w)))
        yp = y if w_pad == w else jnp.pad(y, ((0, 0), (0, 0), (0, 0), (0, w_pad - w)))

        ih = np.arange(h)
        iw = np.arange(w_pad)
        cnt_h = np.minimum(ih + r, h - 1) - np.maximum(ih - r, 0) + 1
        cnt_w = np.maximum(np.minimum(iw + r, w - 1) - np.maximum(iw - r, 0) + 1, 1)
        inv_n = jnp.asarray(1.0 / (cnt_h[:, None] * cnt_w[None, :]),
                            dtype=jnp.float32)

        cyb = 1 if cy == 1 else c_block
        y_idx = (lambda b, cb: (b, 0, 0, 0)) if cy == 1 else \
                (lambda b, cb: (b, cb, 0, 0))

        kernel = functools.partial(_gf_whole_kernel, r=r, eps=float(eps),
                                   h=h, w_arr=w_pad, w_valid=w)
        out = pl.pallas_call(
            kernel,
            out_shape=jax.ShapeDtypeStruct((n, c, h, w_pad), x.dtype),
            grid=(n, c // c_block),
            in_specs=[pl.BlockSpec((None, c_block, h, w_pad),
                                   lambda b, cb: (b, cb, 0, 0)),
                      pl.BlockSpec((None, cyb, h, w_pad), y_idx),
                      pl.BlockSpec((h, w_pad), lambda b, cb: (0, 0))],
            out_specs=pl.BlockSpec((None, c_block, h, w_pad),
                                   lambda b, cb: (b, cb, 0, 0)),
            compiler_params=pltpu.CompilerParams(
                dimension_semantics=("parallel", "parallel"),
                vmem_limit_bytes=int(vmem_limit)),
        )(xp, yp, inv_n)
        return out[..., :w] if w_pad != w else out

    # ----------------- path B: H-tiled with a 2r-row halo -------------------
    if h_tile is None:
        h_cap = _round_up(h, 8)
        ht, cand = 8, 8
        while cand <= h_cap:
            if fits(1, cand + 4 * r):
                ht = cand
            cand += 8
        h_tile = ht
    h_tile = max(8, min(_round_up(int(h_tile), 8), _round_up(h, 8)))
    h_out = _round_up(h, h_tile)
    n_t = h_out // h_tile
    h_win = h_tile + 4 * r
    if c_block is None:
        c_block = _largest_divisor(c, c, lambda d: fits(d, h_win))
    assert c % c_block == 0
    cyb = 1 if cy == 1 else c_block

    pads_h = (2 * r, (h_out - h) + 2 * r)
    pads_w = (0, w_pad - w)
    xp = jnp.pad(x, ((0, 0), (0, 0), pads_h, pads_w))
    yp = jnp.pad(y, ((0, 0), (0, 0), pads_h, pads_w))

    kernel = functools.partial(_gf_htile_kernel, r=r, eps=float(eps),
                               h_true=h, h_tile=h_tile, h_win=h_win,
                               w_arr=w_pad, w_valid=w,
                               c_block=c_block, c_y=cy)
    out = pl.pallas_call(
        kernel,
        out_shape=jax.ShapeDtypeStruct((n, c, h_out, w_pad), x.dtype),
        grid=(n, c // c_block, n_t),
        in_specs=[pl.BlockSpec(memory_space=pl.ANY),
                  pl.BlockSpec(memory_space=pl.ANY)],
        out_specs=pl.BlockSpec((None, c_block, h_tile, w_pad),
                               lambda b, cb, t: (b, cb, t, 0)),
        scratch_shapes=[pltpu.VMEM((1, c_block, h_win, w_pad), x.dtype),
                        pltpu.VMEM((1, cyb, h_win, w_pad), y.dtype),
                        pltpu.SemaphoreType.DMA((2,))],
        compiler_params=pltpu.CompilerParams(
            dimension_semantics=("parallel", "parallel", "parallel"),
            vmem_limit_bytes=int(vmem_limit)),
    )(xp, yp)
    out = out[..., :h, :] if h_out != h else out
    return out[..., :w] if w_pad != w else out


# -------------------- pure-JAX reference (mirrors PyTorch) ------------------ #
def _diff_x(a, r):
    left = a[:, :, r:2 * r + 1]
    middle = a[:, :, 2 * r + 1:] - a[:, :, :-2 * r - 1]
    right = a[:, :, -1:] - a[:, :, -2 * r - 1:-r - 1]
    return jnp.concatenate([left, middle, right], axis=2)


def _diff_y(a, r):
    left = a[:, :, :, r:2 * r + 1]
    middle = a[:, :, :, 2 * r + 1:] - a[:, :, :, :-2 * r - 1]
    right = a[:, :, :, -1:] - a[:, :, :, -2 * r - 1:-r - 1]
    return jnp.concatenate([left, middle, right], axis=3)


def _boxfilter_ref(x, r):
    return _diff_y(_diff_x(jnp.cumsum(x, axis=2), r).cumsum(axis=3), r)


def guided_filter_ref(x, y, r, eps=1e-8):
    h, w = x.shape[2], x.shape[3]
    n = _boxfilter_ref(jnp.ones((1, 1, h, w), x.dtype), r)
    mean_x = _boxfilter_ref(x, r) / n
    mean_y = _boxfilter_ref(y, r) / n
    cov_xy = _boxfilter_ref(x * y, r) / n - mean_x * mean_y
    var_x = _boxfilter_ref(x * x, r) / n - mean_x * mean_x
    a = cov_xy / (var_x + eps)
    b = mean_y - a * mean_x
    mean_a = _boxfilter_ref(a, r) / n
    mean_b = _boxfilter_ref(b, r) / n
    return mean_a * x + mean_b


# --------------------------------- main ------------------------------------- #
if __name__ == "__main__":
    key = jax.random.PRNGKey(0)
    k1, k2, k3, k4, k5, k6 = jax.random.split(key, 6)

    def check(out, ref, name):
        np.testing.assert_allclose(np.asarray(out), np.asarray(ref),
                                   rtol=2e-3, atol=2e-3, err_msg=name)

    # 1) small NCHW, full-channel guide (path A, shifted-add box)
    x = jax.random.normal(k1, (2, 4, 16, 16), dtype=jnp.float32)
    y = jax.random.normal(k2, (2, 4, 16, 16), dtype=jnp.float32)
    check(jax.block_until_ready(guided_filter(x, y, r=2)),
          guided_filter_ref(x, y, r=2), "full-guide r=2")

    # 2) single-channel guide (no HBM/VMEM replication of y)
    y1 = jax.random.normal(k3, (2, 1, 16, 16), dtype=jnp.float32)
    check(jax.block_until_ready(guided_filter(x, y1, r=2)),
          guided_filter_ref(x, y1, r=2), "1ch-guide r=2")

    # 3) larger radius -> prefix-scan box on both axes; N=1 exercises the
    #    >=2-grid-programs cap for v7x's two TensorCores
    x3 = jax.random.normal(k4, (1, 4, 24, 24), dtype=jnp.float32)
    y3 = jax.random.normal(k5, (1, 4, 24, 24), dtype=jnp.float32)
    check(jax.block_until_ready(guided_filter(x3, y3, r=7)),
          guided_filter_ref(x3, y3, r=7), "prefix r=7")

    # 4) forced H-tiling (2r halo windows, manual DMA path), 1-channel guide,
    #    H not a multiple of the tile (bottom pad + crop)
    x4 = jax.random.normal(k6, (1, 2, 20, 20), dtype=jnp.float32)
    y4 = jax.random.normal(k2, (1, 1, 20, 20), dtype=jnp.float32)
    check(jax.block_until_ready(guided_filter(x4, y4, r=2, h_tile=8)),
          guided_filter_ref(x4, y4, r=2), "h-tiled 1ch r=2")

    # 5) forced H-tiling with a full-channel guide
    y5 = jax.random.normal(k3, (1, 2, 20, 20), dtype=jnp.float32)
    check(jax.block_until_ready(guided_filter(x4, y5, r=2, h_tile=8)),
          guided_filter_ref(x4, y5, r=2), "h-tiled r=2")

    print("KERNEL_OK")
</pallas_src>

<mosaic_0001>
module attributes {stable_mosaic.version = 11 : i64} {
  func.func @_gf_whole_kernel(%arg0: i32, %arg1: i32, %arg2: memref<1x4x16x128xf32, #tpu.memory_space<vmem>>, %arg3: memref<1x4x16x128xf32, #tpu.memory_space<vmem>>, %arg4: memref<16x128xf32, #tpu.memory_space<vmem>>, %arg5: memref<1x4x16x128xf32, #tpu.memory_space<vmem>>) attributes {dimension_semantics = [#tpu.dimension_semantics<parallel>, #tpu.dimension_semantics<parallel>], iteration_bounds = array<i64: 2, 1>, scalar_prefetch = 0 : i64, scratch_operands = 0 : i64, tpu.core_type = #tpu.core_type<tc>, window_params = [{transform_indices = @transform_0, window_bounds = array<i64: 1, 4, 16, 128>}, {transform_indices = @transform_1, window_bounds = array<i64: 1, 4, 16, 128>}, {pipeline_mode = #tpu.pipeline_mode<synchronous>, transform_indices = @transform_2, window_bounds = array<i64: 16, 128>}, {transform_indices = @transform_3, window_bounds = array<i64: 1, 4, 16, 128>}]} {
    %c0 = arith.constant 0 : index
    %c0_0 = arith.constant 0 : index
    %c0_1 = arith.constant 0 : index
    %c0_2 = arith.constant 0 : index
    %0 = vector.load %arg2[%c0, %c0_0, %c0_1, %c0_2] : memref<1x4x16x128xf32, #tpu.memory_space<vmem>>, vector<1x4x16x128xf32>
    %1 = vector.shape_cast %0 : vector<1x4x16x128xf32> to vector<4x16x128xf32>
    %c0_3 = arith.constant 0 : index
    %c0_4 = arith.constant 0 : index
    %c0_5 = arith.constant 0 : index
    %c0_6 = arith.constant 0 : index
    %2 = vector.load %arg3[%c0_3, %c0_4, %c0_5, %c0_6] : memref<1x4x16x128xf32, #tpu.memory_space<vmem>>, vector<1x4x16x128xf32>
    %3 = vector.shape_cast %2 : vector<1x4x16x128xf32> to vector<4x16x128xf32>
    %c0_7 = arith.constant 0 : index
    %c0_8 = arith.constant 0 : index
    %4 = vector.load %arg4[%c0_7, %c0_8] : memref<16x128xf32, #tpu.memory_space<vmem>>, vector<16x128xf32>
    %5 = tpu.iota {dimensions = array<i32: 1>} : vector<1x128xi32>
    %c14_i32 = arith.constant 14 : i32
    %6 = vector.broadcast %c14_i32 : i32 to vector<1x128xi32>
    %7 = arith.cmpi sle, %5, %6 : vector<1x128xi32>
    %8 = arith.extui %7 : vector<1x128xi1> to vector<1x128xi32>
    %9 = arith.sitofp %8 : vector<1x128xi32> to vector<1x128xf32>
    %c13_i32 = arith.constant 13 : i32
    %10 = vector.broadcast %c13_i32 : i32 to vector<1x128xi32>
    %11 = arith.cmpi sle, %5, %10 : vector<1x128xi32>
    %12 = arith.extui %11 : vector<1x128xi1> to vector<1x128xi32>
    %13 = arith.sitofp %12 : vector<1x128xi32> to vector<1x128xf32>
    %c1_i32 = arith.constant 1 : i32
    %14 = vector.broadcast %c1_i32 : i32 to vector<1x128xi32>
    %15 = arith.cmpi sge, %5, %14 : vector<1x128xi32>
    %16 = arith.extui %15 : vector<1x128xi1> to vector<1x128xi32>
    %17 = arith.sitofp %16 : vector<1x128xi32> to vector<1x128xf32>
    %c2_i32 = arith.constant 2 : i32
    %18 = vector.broadcast %c2_i32 : i32 to vector<1x128xi32>
    %19 = arith.cmpi sge, %5, %18 : vector<1x128xi32>
    %20 = arith.extui %19 : vector<1x128xi1> to vector<1x128xi32>
    %21 = arith.sitofp %20 : vector<1x128xi32> to vector<1x128xf32>
    %22 = arith.mulf %1, %3 : vector<4x16x128xf32>
    %23 = arith.mulf %1, %1 : vector<4x16x128xf32>
    %24 = vector.shape_cast %1 : vector<4x16x128xf32> to vector<64x128xf32>
    %c127_i32 = arith.constant 127 : i32
    %25 = tpu.dynamic_rotate %24 by %c127_i32 dim 1 : vector<64x128xf32>, i32 -> vector<64x128xf32>
    %26 = vector.broadcast %9 : vector<1x128xf32> to vector<64x128xf32>
    %27 = arith.mulf %26, %25 : vector<64x128xf32>
    %28 = arith.addf %24, %27 : vector<64x128xf32>
    %c1_i32_9 = arith.constant 1 : i32
    %29 = tpu.dynamic_rotate %24 by %c1_i32_9 dim 1 : vector<64x128xf32>, i32 -> vector<64x128xf32>
    %30 = vector.broadcast %17 : vector<1x128xf32> to vector<64x128xf32>
    %31 = arith.mulf %30, %29 : vector<64x128xf32>
    %32 = arith.addf %28, %31 : vector<64x128xf32>
    %c126_i32 = arith.constant 126 : i32
    %33 = tpu.dynamic_rotate %24 by %c126_i32 dim 1 : vector<64x128xf32>, i32 -> vector<64x128xf32>
    %34 = vector.broadcast %13 : vector<1x128xf32> to vector<64x128xf32>
    %35 = arith.mulf %34, %33 : vector<64x128xf32>
    %36 = arith.addf %32, %35 : vector<64x128xf32>
    %c2_i32_10 = arith.constant 2 : i32
    %37 = tpu.dynamic_rotate %24 by %c2_i32_10 dim 1 : vector<64x128xf32>, i32 -> vector<64x128xf32>
    %38 = vector.broadcast %21 : vector<1x128xf32> to vector<64x128xf32>
    %39 = arith.mulf %38, %37 : vector<64x128xf32>
    %40 = arith.addf %36, %39 : vector<64x128xf32>
    %41 = tpu.iota {dimensions = array<i32: 0>} : vector<16x1xi32>
    %42 = vector.shape_cast %41 : vector<16x1xi32> to vector<1x16x1xi32>
    %43 = vector.broadcast %42 : vector<1x16x1xi32> to vector<4x16x1xi32>
    %44 = vector.shape_cast %43 : vector<4x16x1xi32> to vector<64x1xi32>
    %c0_i32 = arith.constant 0 : i32
    %45 = vector.broadcast %c0_i32 : i32 to vector<64x1xi32>
    %46 = arith.addi %44, %45 : vector<64x1xi32>
    %c14_i32_11 = arith.constant 14 : i32
    %47 = vector.broadcast %c14_i32_11 : i32 to vector<64x1xi32>
    %48 = arith.cmpi sle, %46, %47 : vector<64x1xi32>
    %c1_i32_12 = arith.constant 1 : i32
    %49 = vector.broadcast %c1_i32_12 : i32 to vector<64x1xi32>
    %50 = arith.cmpi sge, %46, %49 : vector<64x1xi32>
    %51 = arith.extui %48 : vector<64x1xi1> to vector<64x1xi32>
    %52 = arith.sitofp %51 : vector<64x1xi32> to vector<64x1xf32>
    %53 = arith.extui %50 : vector<64x1xi1> to vector<64x1xi32>
    %54 = arith.sitofp %53 : vector<64x1xi32> to vector<64x1xf32>
    %c13_i32_13 = arith.constant 13 : i32
    %55 = vector.broadcast %c13_i32_13 : i32 to vector<64x1xi32>
    %56 = arith.cmpi sle, %46, %55 : vector<64x1xi32>
    %c2_i32_14 = arith.constant 2 : i32
    %57 = vector.broadcast %c2_i32_14 : i32 to vector<64x1xi32>
    %58 = arith.cmpi sge, %46, %57 : vector<64x1xi32>
    %59 = arith.extui %56 : vector<64x1xi1> to vector<64x1xi32>
    %60 = arith.sitofp %59 : vector<64x1xi32> to vector<64x1xf32>
    %61 = arith.extui %58 : vector<64x1xi1> to vector<64x1xi32>
    %62 = arith.sitofp %61 : vector<64x1xi32> to vector<64x1xf32>
    %c63_i32 = arith.constant 63 : i32
    %63 = tpu.dynamic_rotate %40 by %c63_i32 dim 0 : vector<64x128xf32>, i32 -> vector<64x128xf32>
    %64 = vector.broadcast %52 : vector<64x1xf32> to vector<64x128xf32>
    %65 = arith.mulf %64, %63 : vector<64x128xf32>
    %66 = arith.addf %40, %65 : vector<64x128xf32>
    %c1_i32_15 = arith.constant 1 : i32
    %67 = tpu.dynamic_rotate %40 by %c1_i32_15 dim 0 : vector<64x128xf32>, i32 -> vector<64x128xf32>
    %68 = vector.broadcast %54 : vector<64x1xf32> to vector<64x128xf32>
    %69 = arith.mulf %68, %67 : vector<64x128xf32>
    %70 = arith.addf %66, %69 : vector<64x128xf32>
    %c62_i32 = arith.constant 62 : i32
    %71 = tpu.dynamic_rotate %40 by %c62_i32 dim 0 : vector<64x128xf32>, i32 -> vector<64x128xf32>
    %72 = vector.broadcast %60 : vector<64x1xf32> to vector<64x128xf32>
    %73 = arith.mulf %72, %71 : vector<64x128xf32>
    %74 = arith.addf %70, %73 : vector<64x128xf32>
    %c2_i32_16 = arith.constant 2 : i32
    %75 = tpu.dynamic_rotate %40 by %c2_i32_16 dim 0 : vector<64x128xf32>, i32 -> vector<64x128xf32>
    %76 = vector.broadcast %62 : vector<64x1xf32> to vector<64x128xf32>
    %77 = arith.mulf %76, %75 : vector<64x128xf32>
    %78 = arith.addf %74, %77 : vector<64x128xf32>
    %79 = vector.shape_cast %78 : vector<64x128xf32> to vector<4x16x128xf32>
    %80 = vector.shape_cast %23 : vector<4x16x128xf32> to vector<64x128xf32>
    %c127_i32_17 = arith.constant 127 : i32
    %81 = tpu.dynamic_rotate %80 by %c127_i32_17 dim 1 : vector<64x128xf32>, i32 -> vector<64x128xf32>
    %82 = vector.broadcast %9 : vector<1x128xf32> to vector<64x128xf32>
    %83 = arith.mulf %82, %81 : vector<64x128xf32>
    %84 = arith.addf %80, %83 : vector<64x128xf32>
    %c1_i32_18 = arith.constant 1 : i32
    %85 = tpu.dynamic_rotate %80 by %c1_i32_18 dim 1 : vector<64x128xf32>, i32 -> vector<64x128xf32>
    %86 = vector.broadcast %17 : vector<1x128xf32> to vector<64x128xf32>
    %87 = arith.mulf %86, %85 : vector<64x128xf32>
    %88 = arith.addf %84, %87 : vector<64x128xf32>
    %c126_i32_19 = arith.constant 126 : i32
    %89 = tpu.dynamic_rotate %80 by %c126_i32_19 dim 1 : vector<64x128xf32>, i32 -> vector<64x128xf32>
    %90 = vector.broadcast %13 : vector<1x128xf32> to vector<64x128xf32>
    %91 = arith.mulf %90, %89 : vector<64x128xf32>
    %92 = arith.addf %88, %91 : vector<64x128xf32>
    %c2_i32_20 = arith.constant 2 : i32
    %93 = tpu.dynamic_rotate %80 by %c2_i32_20 dim 1 : vector<64x128xf32>, i32 -> vector<64x128xf32>
    %94 = vector.broadcast %21 : vector<1x128xf32> to vector<64x128xf32>
    %95 = arith.mulf %94, %93 : vector<64x128xf32>
    %96 = arith.addf %92, %95 : vector<64x128xf32>
    %c63_i32_21 = arith.constant 63 : i32
    %97 = tpu.dynamic_rotate %96 by %c63_i32_21 dim 0 : vector<64x128xf32>, i32 -> vector<64x128xf32>
    %98 = vector.broadcast %52 : vector<64x1xf32> to vector<64x128xf32>
    %99 = arith.mulf %98, %97 : vector<64x128xf32>
    %100 = arith.addf %96, %99 : vector<64x128xf32>
    %c1_i32_22 = arith.constant 1 : i32
    %101 = tpu.dynamic_rotate %96 by %c1_i32_22 dim 0 : vector<64x128xf32>, i32 -> vector<64x128xf32>
    %102 = vector.broadcast %54 : vector<64x1xf32> to vector<64x128xf32>
    %103 = arith.mulf %102, %101 : vector<64x128xf32>
    %104 = arith.addf %100, %103 : vector<64x128xf32>
    %c62_i32_23 = arith.constant 62 : i32
    %105 = tpu.dynamic_rotate %96 by %c62_i32_23 dim 0 : vector<64x128xf32>, i32 -> vector<64x128xf32>
    %106 = vector.broadcast %60 : vector<64x1xf32> to vector<64x128xf32>
    %107 = arith.mulf %106, %105 : vector<64x128xf32>
    %108 = arith.addf %104, %107 : vector<64x128xf32>
    %c2_i32_24 = arith.constant 2 : i32
    %109 = tpu.dynamic_rotate %96 by %c2_i32_24 dim 0 : vector<64x128xf32>, i32 -> vector<64x128xf32>
    %110 = vector.broadcast %62 : vector<64x1xf32> to vector<64x128xf32>
    %111 = arith.mulf %110, %109 : vector<64x128xf32>
    %112 = arith.addf %108, %111 : vector<64x128xf32>
    %113 = vector.shape_cast %112 : vector<64x128xf32> to vector<4x16x128xf32>
    %114 = vector.shape_cast %22 : vector<4x16x128xf32> to vector<64x128xf32>
    %c127_i32_25 = arith.constant 127 : i32
    %115 = tpu.dynamic_rotate %114 by %c127_i32_25 dim 1 : vector<64x128xf32>, i32 -> vector<64x128xf32>
    %116 = vector.broadcast %9 : vector<1x128xf32> to vector<64x128xf32>
    %117 = arith.mulf %116, %115 : vector<64x128xf32>
    %118 = arith.addf %114, %117 : vector<64x128xf32>
    %c1_i32_26 = arith.constant 1 : i32
    %119 = tpu.dynamic_rotate %114 by %c1_i32_26 dim 1 : vector<64x128xf32>, i32 -> vector<64x128xf32>
    %120 = vector.broadcast %17 : vector<1x128xf32> to vector<64x128xf32>
    %121 = arith.mulf %120, %119 : vector<64x128xf32>
    %122 = arith.addf %118, %121 : vector<64x128xf32>
    %c126_i32_27 = arith.constant 126 : i32
    %123 = tpu.dynamic_rotate %114 by %c126_i32_27 dim 1 : vector<64x128xf32>, i32 -> vector<64x128xf32>
    %124 = vector.broadcast %13 : vector<1x128xf32> to vector<64x128xf32>
    %125 = arith.mulf %124, %123 : vector<64x128xf32>
    %126 = arith.addf %122, %125 : vector<64x128xf32>
    %c2_i32_28 = arith.constant 2 : i32
    %127 = tpu.dynamic_rotate %114 by %c2_i32_28 dim 1 : vector<64x128xf32>, i32 -> vector<64x128xf32>
    %128 = vector.broadcast %21 : vector<1x128xf32> to vector<64x128xf32>
    %129 = arith.mulf %128, %127 : vector<64x128xf32>
    %130 = arith.addf %126, %129 : vector<64x128xf32>
    %c63_i32_29 = arith.constant 63 : i32
    %131 = tpu.dynamic_rotate %130 by %c63_i32_29 dim 0 : vector<64x128xf32>, i32 -> vector<64x128xf32>
    %132 = vector.broadcast %52 : vector<64x1xf32> to vector<64x128xf32>
    %133 = arith.mulf %132, %131 : vector<64x128xf32>
    %134 = arith.addf %130, %133 : vector<64x128xf32>
    %c1_i32_30 = arith.constant 1 : i32
    %135 = tpu.dynamic_rotate %130 by %c1_i32_30 dim 0 : vector<64x128xf32>, i32 -> vector<64x128xf32>
    %136 = vector.broadcast %54 : vector<64x1xf32> to vector<64x128xf32>
    %137 = arith.mulf %136, %135 : vector<64x128xf32>
    %138 = arith.addf %134, %137 : vector<64x128xf32>
    %c62_i32_31 = arith.constant 62 : i32
    %139 = tpu.dynamic_rotate %130 by %c62_i32_31 dim 0 : vector<64x128xf32>, i32 -> vector<64x128xf32>
    %140 = vector.broadcast %60 : vector<64x1xf32> to vector<64x128xf32>
    %141 = arith.mulf %140, %139 : vector<64x128xf32>
    %142 = arith.addf %138, %141 : vector<64x128xf32>
    %c2_i32_32 = arith.constant 2 : i32
    %143 = tpu.dynamic_rotate %130 by %c2_i32_32 dim 0 : vector<64x128xf32>, i32 -> vector<64x128xf32>
    %144 = vector.broadcast %62 : vector<64x1xf32> to vector<64x128xf32>
    %145 = arith.mulf %144, %143 : vector<64x128xf32>
    %146 = arith.addf %142, %145 : vector<64x128xf32>
    %147 = vector.shape_cast %146 : vector<64x128xf32> to vector<4x16x128xf32>
    %148 = vector.shape_cast %3 : vector<4x16x128xf32> to vector<64x128xf32>
    %c127_i32_33 = arith.constant 127 : i32
    %149 = tpu.dynamic_rotate %148 by %c127_i32_33 dim 1 : vector<64x128xf32>, i32 -> vector<64x128xf32>
    %150 = vector.broadcast %9 : vector<1x128xf32> to vector<64x128xf32>
    %151 = arith.mulf %150, %149 : vector<64x128xf32>
    %152 = arith.addf %148, %151 : vector<64x128xf32>
    %c1_i32_34 = arith.constant 1 : i32
    %153 = tpu.dynamic_rotate %148 by %c1_i32_34 dim 1 : vector<64x128xf32>, i32 -> vector<64x128xf32>
    %154 = vector.broadcast %17 : vector<1x128xf32> to vector<64x128xf32>
    %155 = arith.mulf %154, %153 : vector<64x128xf32>
    %156 = arith.addf %152, %155 : vector<64x128xf32>
    %c126_i32_35 = arith.constant 126 : i32
    %157 = tpu.dynamic_rotate %148 by %c126_i32_35 dim 1 : vector<64x128xf32>, i32 -> vector<64x128xf32>
    %158 = vector.broadcast %13 : vector<1x128xf32> to vector<64x128xf32>
    %159 = arith.mulf %158, %157 : vector<64x128xf32>
    %160 = arith.addf %156, %159 : vector<64x128xf32>
    %c2_i32_36 = arith.constant 2 : i32
    %161 = tpu.dynamic_rotate %148 by %c2_i32_36 dim 1 : vector<64x128xf32>, i32 -> vector<64x128xf32>
    %162 = vector.broadcast %21 : vector<1x128xf32> to vector<64x128xf32>
    %163 = arith.mulf %162, %161 : vector<64x128xf32>
    %164 = arith.addf %160, %163 : vector<64x128xf32>
    %c63_i32_37 = arith.constant 63 : i32
    %165 = tpu.dynamic_rotate %164 by %c63_i32_37 dim 0 : vector<64x128xf32>, i32 -> vector<64x128xf32>
    %166 = vector.broadcast %52 : vector<64x1xf32> to vector<64x128xf32>
    %167 = arith.mulf %166, %165 : vector<64x128xf32>
    %168 = arith.addf %164, %167 : vector<64x128xf32>
    %c1_i32_38 = arith.constant 1 : i32
    %169 = tpu.dynamic_rotate %164 by %c1_i32_38 dim 0 : vector<64x128xf32>, i32 -> vector<64x128xf32>
    %170 = vector.broadcast %54 : vector<64x1xf32> to vector<64x128xf32>
    %171 = arith.mulf %170, %169 : vector<64x128xf32>
    %172 = arith.addf %168, %171 : vector<64x128xf32>
    %c62_i32_39 = arith.constant 62 : i32
    %173 = tpu.dynamic_rotate %164 by %c62_i32_39 dim 0 : vector<64x128xf32>, i32 -> vector<64x128xf32>
    %174 = vector.broadcast %60 : vector<64x1xf32> to vector<64x128xf32>
    %175 = arith.mulf %174, %173 : vector<64x128xf32>
    %176 = arith.addf %172, %175 : vector<64x128xf32>
    %c2_i32_40 = arith.constant 2 : i32
    %177 = tpu.dynamic_rotate %164 by %c2_i32_40 dim 0 : vector<64x128xf32>, i32 -> vector<64x128xf32>
    %178 = vector.broadcast %62 : vector<64x1xf32> to vector<64x128xf32>
    %179 = arith.mulf %178, %177 : vector<64x128xf32>
    %180 = arith.addf %176, %179 : vector<64x128xf32>
    %181 = vector.shape_cast %180 : vector<64x128xf32> to vector<4x16x128xf32>
    %182 = vector.shape_cast %4 : vector<16x128xf32> to vector<1x16x128xf32>
    %183 = vector.broadcast %182 : vector<1x16x128xf32> to vector<4x16x128xf32>
    %184 = arith.mulf %79, %183 : vector<4x16x128xf32>
    %185 = vector.shape_cast %4 : vector<16x128xf32> to vector<1x16x128xf32>
    %186 = vector.broadcast %185 : vector<1x16x128xf32> to vector<4x16x128xf32>
    %187 = arith.mulf %181, %186 : vector<4x16x128xf32>
    %188 = vector.shape_cast %4 : vector<16x128xf32> to vector<1x16x128xf32>
    %189 = vector.broadcast %188 : vector<1x16x128xf32> to vector<4x16x128xf32>
    %190 = arith.mulf %147, %189 : vector<4x16x128xf32>
    %191 = arith.mulf %184, %187 : vector<4x16x128xf32>
    %192 = arith.subf %190, %191 : vector<4x16x128xf32>
    %193 = vector.shape_cast %4 : vector<16x128xf32> to vector<1x16x128xf32>
    %194 = vector.broadcast %193 : vector<1x16x128xf32> to vector<4x16x128xf32>
    %195 = arith.mulf %113, %194 : vector<4x16x128xf32>
    %196 = arith.mulf %184, %184 : vector<4x16x128xf32>
    %197 = arith.subf %195, %196 : vector<4x16x128xf32>
    %cst = arith.constant 9.99999993E-9 : f32
    %198 = vector.broadcast %cst : f32 to vector<4x16x128xf32>
    %199 = arith.addf %197, %198 : vector<4x16x128xf32>
    %200 = tpu.reciprocal %199 {approx = true} : vector<4x16x128xf32> -> vector<4x16x128xf32>
    %201 = arith.mulf %199, %200 : vector<4x16x128xf32>
    %cst_41 = arith.constant 2.000000e+00 : f32
    %202 = vector.broadcast %cst_41 : f32 to vector<4x16x128xf32>
    %203 = arith.subf %202, %201 : vector<4x16x128xf32>
    %204 = arith.mulf %200, %203 : vector<4x16x128xf32>
    %205 = arith.mulf %192, %204 : vector<4x16x128xf32>
    %206 = arith.mulf %205, %184 : vector<4x16x128xf32>
    %207 = arith.subf %187, %206 : vector<4x16x128xf32>
    %208 = vector.shape_cast %205 : vector<4x16x128xf32> to vector<64x128xf32>
    %c127_i32_42 = arith.constant 127 : i32
    %209 = tpu.dynamic_rotate %208 by %c127_i32_42 dim 1 : vector<64x128xf32>, i32 -> vector<64x128xf32>
    %210 = vector.broadcast %9 : vector<1x128xf32> to vector<64x128xf32>
    %211 = arith.mulf %210, %209 : vector<64x128xf32>
    %212 = arith.addf %208, %211 : vector<64x128xf32>
    %c1_i32_43 = arith.constant 1 : i32
    %213 = tpu.dynamic_rotate %208 by %c1_i32_43 dim 1 : vector<64x128xf32>, i32 -> vector<64x128xf32>
    %214 = vector.broadcast %17 : vector<1x128xf32> to vector<64x128xf32>
    %215 = arith.mulf %214, %213 : vector<64x128xf32>
    %216 = arith.addf %212, %215 : vector<64x128xf32>
    %c126_i32_44 = arith.constant 126 : i32
    %217 = tpu.dynamic_rotate %208 by %c126_i32_44 dim 1 : vector<64x128xf32>, i32 -> vector<64x128xf32>
    %218 = vector.broadcast %13 : vector<1x128xf32> to vector<64x128xf32>
    %219 = arith.mulf %218, %217 : vector<64x128xf32>
    %220 = arith.addf %216, %219 : vector<64x128xf32>
    %c2_i32_45 = arith.constant 2 : i32
    %221 = tpu.dynamic_rotate %208 by %c2_i32_45 dim 1 : vector<64x128xf32>, i32 -> vector<64x128xf32>
    %222 = vector.broadcast %21 : vector<1x128xf32> to vector<64x128xf32>
    %223 = arith.mulf %222, %221 : vector<64x128xf32>
    %224 = arith.addf %220, %223 : vector<64x128xf32>
    %c63_i32_46 = arith.constant 63 : i32
    %225 = tpu.dynamic_rotate %224 by %c63_i32_46 dim 0 : vector<64x128xf32>, i32 -> vector<64x128xf32>
    %226 = vector.broadcast %52 : vector<64x1xf32> to vector<64x128xf32>
    %227 = arith.mulf %226, %225 : vector<64x128xf32>
    %228 = arith.addf %224, %227 : vector<64x128xf32>
    %c1_i32_47 = arith.constant 1 : i32
    %229 = tpu.dynamic_rotate %224 by %c1_i32_47 dim 0 : vector<64x128xf32>, i32 -> vector<64x128xf32>
    %230 = vector.broadcast %54 : vector<64x1xf32> to vector<64x128xf32>
    %231 = arith.mulf %230, %229 : vector<64x128xf32>
    %232 = arith.addf %228, %231 : vector<64x128xf32>
    %c62_i32_48 = arith.constant 62 : i32
    %233 = tpu.dynamic_rotate %224 by %c62_i32_48 dim 0 : vector<64x128xf32>, i32 -> vector<64x128xf32>
    %234 = vector.broadcast %60 : vector<64x1xf32> to vector<64x128xf32>
    %235 = arith.mulf %234, %233 : vector<64x128xf32>
    %236 = arith.addf %232, %235 : vector<64x128xf32>
    %c2_i32_49 = arith.constant 2 : i32
    %237 = tpu.dynamic_rotate %224 by %c2_i32_49 dim 0 : vector<64x128xf32>, i32 -> vector<64x128xf32>
    %238 = vector.broadcast %62 : vector<64x1xf32> to vector<64x128xf32>
    %239 = arith.mulf %238, %237 : vector<64x128xf32>
    %240 = arith.addf %236, %239 : vector<64x128xf32>
    %241 = vector.shape_cast %240 : vector<64x128xf32> to vector<4x16x128xf32>
    %242 = vector.shape_cast %207 : vector<4x16x128xf32> to vector<64x128xf32>
    %c127_i32_50 = arith.constant 127 : i32
    %243 = tpu.dynamic_rotate %242 by %c127_i32_50 dim 1 : vector<64x128xf32>, i32 -> vector<64x128xf32>
    %244 = vector.broadcast %9 : vector<1x128xf32> to vector<64x128xf32>
    %245 = arith.mulf %244, %243 : vector<64x128xf32>
    %246 = arith.addf %242, %245 : vector<64x128xf32>
    %c1_i32_51 = arith.constant 1 : i32
    %247 = tpu.dynamic_rotate %242 by %c1_i32_51 dim 1 : vector<64x128xf32>, i32 -> vector<64x128xf32>
    %248 = vector.broadcast %17 : vector<1x128xf32> to vector<64x128xf32>
    %249 = arith.mulf %248, %247 : vector<64x128xf32>
    %250 = arith.addf %246, %249 : vector<64x128xf32>
    %c126_i32_52 = arith.constant 126 : i32
    %251 = tpu.dynamic_rotate %242 by %c126_i32_52 dim 1 : vector<64x128xf32>, i32 -> vector<64x128xf32>
    %252 = vector.broadcast %13 : vector<1x128xf32> to vector<64x128xf32>
    %253 = arith.mulf %252, %251 : vector<64x128xf32>
    %254 = arith.addf %250, %253 : vector<64x128xf32>
    %c2_i32_53 = arith.constant 2 : i32
    %255 = tpu.dynamic_rotate %242 by %c2_i32_53 dim 1 : vector<64x128xf32>, i32 -> vector<64x128xf32>
    %256 = vector.broadcast %21 : vector<1x128xf32> to vector<64x128xf32>
    %257 = arith.mulf %256, %255 : vector<64x128xf32>
    %258 = arith.addf %254, %257 : vector<64x128xf32>
    %c63_i32_54 = arith.constant 63 : i32
    %259 = tpu.dynamic_rotate %258 by %c63_i32_54 dim 0 : vector<64x128xf32>, i32 -> vector<64x128xf32>
    %260 = vector.broadcast %52 : vector<64x1xf32> to vector<64x128xf32>
    %261 = arith.mulf %260, %259 : vector<64x128xf32>
    %262 = arith.addf %258, %261 : vector<64x128xf32>
    %c1_i32_55 = arith.constant 1 : i32
    %263 = tpu.dynamic_rotate %258 by %c1_i32_55 dim 0 : vector<64x128xf32>, i32 -> vector<64x128xf32>
    %264 = vector.broadcast %54 : vector<64x1xf32> to vector<64x128xf32>
    %265 = arith.mulf %264, %263 : vector<64x128xf32>
    %266 = arith.addf %262, %265 : vector<64x128xf32>
    %c62_i32_56 = arith.constant 62 : i32
    %267 = tpu.dynamic_rotate %258 by %c62_i32_56 dim 0 : vector<64x128xf32>, i32 -> vector<64x128xf32>
    %268 = vector.broadcast %60 : vector<64x1xf32> to vector<64x128xf32>
    %269 = arith.mulf %268, %267 : vector<64x128xf32>
    %270 = arith.addf %266, %269 : vector<64x128xf32>
    %c2_i32_57 = arith.constant 2 : i32
    %271 = tpu.dynamic_rotate %258 by %c2_i32_57 dim 0 : vector<64x128xf32>, i32 -> vector<64x128xf32>
    %272 = vector.broadcast %62 : vector<64x1xf32> to vector<64x128xf32>
    %273 = arith.mulf %272, %271 : vector<64x128xf32>
    %274 = arith.addf %270, %273 : vector<64x128xf32>
    %275 = vector.shape_cast %274 : vector<64x128xf32> to vector<4x16x128xf32>
    %276 = vector.shape_cast %4 : vector<16x128xf32> to vector<1x16x128xf32>
    %277 = vector.broadcast %276 : vector<1x16x128xf32> to vector<4x16x128xf32>
    %278 = arith.mulf %241, %277 : vector<4x16x128xf32>
    %279 = arith.mulf %278, %1 : vector<4x16x128xf32>
    %280 = vector.shape_cast %4 : vector<16x128xf32> to vector<1x16x128xf32>
    %281 = vector.broadcast %280 : vector<1x16x128xf32> to vector<4x16x128xf32>
    %282 = arith.mulf %275, %281 : vector<4x16x128xf32>
    %283 = arith.addf %279, %282 : vector<4x16x128xf32>
    %c0_58 = arith.constant 0 : index
    %c0_59 = arith.constant 0 : index
    %c0_60 = arith.constant 0 : index
    %c0_61 = arith.constant 0 : index
    %284 = vector.load %arg5[%c0_58, %c0_59, %c0_60, %c0_61] : memref<1x4x16x128xf32, #tpu.memory_space<vmem>>, vector<1x4x16x128xf32>
    %285 = vector.shape_cast %284 : vector<1x4x16x128xf32> to vector<4x16x128xf32>
    %286 = vector.shape_cast %283 : vector<4x16x128xf32> to vector<1x4x16x128xf32>
    tpu.vector_store %arg5[%c0_58, %c0_59, %c0_60, %c0_61], %286 {strides = array<i32>} : memref<1x4x16x128xf32, #tpu.memory_space<vmem>>, vector<1x4x16x128xf32>,
    return
  }
  func.func @transform_0(%arg0: i32, %arg1: i32) -> (i32, i32, i32, i32) {
    %c0_i32 = arith.constant 0 : i32
    %c0_i32_0 = arith.constant 0 : i32
    %c0_i32_1 = arith.constant 0 : i32
    return %arg0, %arg1, %c0_i32, %c0_i32_0 : i32, i32, i32, i32
  }
  func.func @transform_1(%arg0: i32, %arg1: i32) -> (i32, i32, i32, i32) {
    %c0_i32 = arith.constant 0 : i32
    %c0_i32_0 = arith.constant 0 : i32
    %c0_i32_1 = arith.constant 0 : i32
    return %arg0, %arg1, %c0_i32, %c0_i32_0 : i32, i32, i32, i32
  }
  func.func @transform_2(%arg0: i32, %arg1: i32) -> (i32, i32) {
    %c0_i32 = arith.constant 0 : i32
    %c0_i32_0 = arith.constant 0 : i32
    %c0_i32_1 = arith.constant 0 : i32
    return %c0_i32, %c0_i32_0 : i32, i32
  }
  func.func @transform_3(%arg0: i32, %arg1: i32) -> (i32, i32, i32, i32) {
    %c0_i32 = arith.constant 0 : i32
    %c0_i32_0 = arith.constant 0 : i32
    %c0_i32_1 = arith.constant 0 : i32
    return %arg0, %arg1, %c0_i32, %c0_i32_0 : i32, i32, i32, i32
  }
}

</mosaic_0001>

<llo_original>
// kernel: tpu_custom_call.1
$region0: #{tpu_custom_call.1}
  #allocation0 [shape = 'u32[]', space=smem, size = 0x4, offset = 0x4, fixed_abs, tag = 'smem constant byte address 0x4 - core index']
  #allocation1 [shape = 'u32[72,128]{1,0:T(1,128)}', space=vmem, size = 0x9000, scoped, tag = 'internal scratch']
  %s0 = inlined_call_operand.hbm [shape: f32[2,4,16,128], index: 0, kind: input, shape index: {}]
  %s1 = inlined_call_operand.hbm [shape: f32[2,4,16,128], index: 1, kind: input, shape index: {}]
  %s2 = inlined_call_operand.hbm [shape: f32[16,128], index: 2, kind: input, shape index: {}]
  %s3 = inlined_call_operand.hbm [shape: f32[2,4,16,128], index: 3, kind: output, shape index: {}]
  %s4 = sld [smem:[#allocation0]]
  $region57: #{tpu_custom_call.1} parent=0
    _
  %s6 = ssub.s32 1, %s4
  %s7 = scalar_select 0, %s6, %s4
  $region1: #{tpu_custom_call.1} parent=0
    #allocation2 [shape = 'u8[65536]{0}', space=vmem, size = 0x10000, scoped, tag = 'input window, operand 0']
    #allocation3 [shape = 's32[2]{0}', space=sflag, size = 0x8, scoped, tag = 'scoped memory for tpu_custom_call.1']
    #allocation4 [shape = 's32[2]{0}', space=sflag, size = 0x8, scoped, tag = 'scoped memory for tpu_custom_call.1']
    #allocation5 [shape = 'u8[65536]{0}', space=vmem, size = 0x10000, scoped, tag = 'input window, operand 1']
    #allocation6 [shape = 's32[2]{0}', space=sflag, size = 0x8, scoped, tag = 'scoped memory for tpu_custom_call.1']
    #allocation7 [shape = 'u8[8192]{0}', space=vmem, size = 0x2000, scoped, tag = 'input window, operand 2, single buffered']
    #allocation8 [shape = 'u8[65536]{0}', space=vmem, size = 0x10000, scoped, tag = 'output window, operand 0']
    %8 = vsyncpa [#allocation3], 0
    %s9 = scalar_lea.sflag [#allocation3], 1
    %10 = vsyncpa %s9, 0
    %11 = vsyncpa [#allocation6], 0
    %s12 = scalar_lea.sflag [#allocation6], 1
    %13 = vsyncpa %s12, 0
    %14 = vsyncpa [#allocation4], 0
    %s15 = scalar_lea.sflag [#allocation4], 1
    %16 = vsyncpa %s15, 0
    loop: start=0, step=1, limit=4
    $region2: #{tpu_custom_call.1} parent=1 // loop_pre_header
      _
    $region3: #{tpu_custom_call.1} parent=1 // loop_header
      %s18 = sphi 0, %s22
      %p19 = scmp.ge.s32.totalorder %s18, 4
      %s25 = sphi 0, %s37
      %s26 = sphi 0, %s33
      %s27 = sphi 0, %s25
      %s28 = sphi 0, %s26
      %s29 = sphi 0, %s27
      %s30 = sphi 0, %s28
      %s42 = sphi 0, %s44
      %s45 = sphi 0, %s42
      %s46 = sphi 0, %s45
      %s62 = sphi 0, %s46
      %s70 = sphi 0, %s72
      %s73 = sphi 0, %s70
      %s74 = sphi 0, %s73
      %s90 = sphi 0, %s74
      %s94 = sphi 0, %s94
      %s96 = sphi 0, %s94
      %s97 = sphi 0, %s96
      %s111 = sphi 0, %s97
      %s119 = sphi 0, %s121
      %s122 = sphi 0, %s119
      %s123 = sphi 0, %s122
      %s139 = sphi 0, %s123
    $region4: #{tpu_custom_call.1} parent=1 // loop_header_branch
      %21 = sbr.rel (%p19) target = $region8
    $region5: #{tpu_custom_call.1} parent=1 // loop_body
      %s23 = ssub.s32 %s18, 1
      %s24 = ssub.s32 %s18, 2
      %s31 = sadd.s32 1, %s26
      %p32 = scmp.ge.s32.totalorder %s31, 1
      %s33 = scalar_select %p32, 0, %s31
      %s34 = sadd.s32 1, %s25
      %s35 = scalar_select %p32, %s34, %s25
      %p36 = scmp.ge.s32.totalorder %s35, 2
      %s37 = scalar_select %p36, 0, %s35
      %s38 = ssub.s32 %s25, %s37
      %s39 = ssub.s32 %s26, %s33
      %s40 = sor.u32 %s38, %s39
      %p41 = scmp.eq.s32.totalorder %s40, 0
      %s43 = sadd.s32 %s42, 1
      %s44 = scalar_select %p41, %s42, %s43
      %p47 = pneg %p41
      %p48 = scmp.eq.s32.totalorder %s18, 1
      %p49 = por %p47, %p48
      %p50 = scmp.ne.s32.totalorder %s42, %s45
      %p51 = scmp.eq.s32.totalorder %s18, 0
      %p52 = por %p50, %p51
      %p53 = scmp.ne.s32.totalorder %s42, %s45
      %p54 = scmp.eq.s32.totalorder %s23, 1
      %p55 = por %p53, %p54
      %p56 = scmp.ne.s32.totalorder %s45, %s46
      %p57 = scmp.eq.s32.totalorder %s23, 0
      %p58 = por %p56, %p57
      %p59 = scmp.ne.s32.totalorder %s45, %s46
      %p60 = scmp.eq.s32.totalorder %s24, 1
      %p61 = por %p59, %p60
      %p63 = scmp.ne.s32.totalorder %s46, %s62
      %p64 = scmp.eq.s32.totalorder %s24, 0
      %p65 = por %p63, %p64
      %s66 = ssub.s32 %s25, %s37
      %s67 = ssub.s32 %s26, %s33
      %s68 = sor.u32 %s66, %s67
      %p69 = scmp.eq.s32.totalorder %s68, 0
      %s71 = sadd.s32 %s70, 1
      %s72 = scalar_select %p69, %s70, %s71
      %p75 = pneg %p69
      %p76 = scmp.eq.s32.totalorder %s18, 1
      %p77 = por %p75, %p76
      %p78 = scmp.ne.s32.totalorder %s70, %s73
      %p79 = scmp.eq.s32.totalorder %s18, 0
      %p80 = por %p78, %p79
      %p81 = scmp.ne.s32.totalorder %s70, %s73
      %p82 = scmp.eq.s32.totalorder %s23, 1
      %p83 = por %p81, %p82
      %p84 = scmp.ne.s32.totalorder %s73, %s74
      %p85 = scmp.eq.s32.totalorder %s23, 0
      %p86 = por %p84, %p85
      %p87 = scmp.ne.s32.totalorder %s73, %s74
      %p88 = scmp.eq.s32.totalorder %s24, 1
      %p89 = por %p87, %p88
      %p91 = scmp.ne.s32.totalorder %s74, %s90
      %p92 = scmp.eq.s32.totalorder %s24, 0
      %p93 = por %p91, %p92
      %s95 = sadd.s32 %s94, 1
      %p98 = scmp.eq.s32.totalorder %s18, 1
      %p99 = scmp.ne.s32.totalorder %s94, %s96
      %p100 = scmp.eq.s32.totalorder %s18, 0
      %p101 = por %p99, %p100
      %p102 = scmp.ne.s32.totalorder %s94, %s96
      %p103 = scmp.eq.s32.totalorder %s23, 1
      %p104 = por %p102, %p103
      %p105 = scmp.ne.s32.totalorder %s96, %s97
      %p106 = scmp.eq.s32.totalorder %s23, 0
      %p107 = por %p105, %p106
      %p108 = scmp.ne.s32.totalorder %s96, %s97
      %p109 = scmp.eq.s32.totalorder %s24, 1
      %p110 = por %p108, %p109
      %p112 = scmp.ne.s32.totalorder %s97, %s111
      %p113 = scmp.eq.s32.totalorder %s24, 0
      %p114 = por %p112, %p113
      %s115 = ssub.s32 %s25, %s37
      %s116 = ssub.s32 %s26, %s33
      %s117 = sor.u32 %s115, %s116
      %p118 = scmp.eq.s32.totalorder %s117, 0
      %s120 = sadd.s32 %s119, 1
      %s121 = scalar_select %p118, %s119, %s120
      %p124 = pneg %p118
      %p125 = scmp.eq.s32.totalorder %s18, 1
      %p126 = por %p124, %p125
      %p127 = scmp.ne.s32.totalorder %s119, %s122
      %p128 = scmp.eq.s32.totalorder %s18, 0
      %p129 = por %p127, %p128
      %p130 = scmp.ne.s32.totalorder %s119, %s122
      %p131 = scmp.eq.s32.totalorder %s23, 1
      %p132 = por %p130, %p131
      %p133 = scmp.ne.s32.totalorder %s122, %s123
      %p134 = scmp.eq.s32.totalorder %s23, 0
      %p135 = por %p133, %p134
      %p136 = scmp.ne.s32.totalorder %s122, %s123
      %p137 = scmp.eq.s32.totalorder %s24, 1
      %p138 = por %p136, %p137
      %p140 = scmp.ne.s32.totalorder %s123, %s139
      %p141 = scmp.eq.s32.totalorder %s24, 0
      %p142 = por %p140, %p141
      %p143 = scmp.le.s32.totalorder 1, %s18
      %p144 = scmp.lt.s32.totalorder %s18, 3
      %p145 = pnand %p143, %p144
      %p146 = pneg %p145
      // Predicated region
      $region9: #{tpu_custom_call.1} parent=5 // pred_check
        _
      $region10: #{tpu_custom_call.1} parent=5 // pred_check_branch
        %148 = sbr.rel (%p145) target = $region12
      $region11: #{tpu_custom_call.1} parent=5 // pred_region
        %s149 = ssub.s32 %s18, 1
        // Predicated region
        $region13: #{tpu_custom_call.1} parent=11 // pred_check
          %p150 = pneg %p107
        $region14: #{tpu_custom_call.1} parent=11 // pred_check_branch
          %152 = sbr.rel (%p150) target = $region16
        $region15: #{tpu_custom_call.1} parent=11 // pred_region
          %154 = vsyncadd [#allocation6], 0
          %s155 = sshll.u32 %s2, 4
          %s156 = int_to_ptr.hbm [resolvable:$true] %s155
          %s157 = sshll.u32 [#allocation7], 4
          %s158 = int_to_ptr.vmem [resolvable:$true] %s157
          %163 = dma.hbm_to_vmem [thread:$0]  %s156, 256, %s158, [#allocation6], 128, 128, 8
        $region16: #{tpu_custom_call.1} parent=11 // pred_fallthru
          _
      $region12: #{tpu_custom_call.1} parent=5 // pred_fallthru
        _
      %p164 = scmp.lt.s32.totalorder %s18, 2
      // Predicated region
      $region17: #{tpu_custom_call.1} parent=5 // pred_check
        %p165 = pneg %p164
      $region18: #{tpu_custom_call.1} parent=5 // pred_check_branch
        %167 = sbr.rel (%p165) target = $region20
      $region19: #{tpu_custom_call.1} parent=5 // pred_region
        // Predicated region
        $region21: #{tpu_custom_call.1} parent=19 // pred_check
          %p168 = pneg %p52
        $region22: #{tpu_custom_call.1} parent=19 // pred_check_branch
          %170 = sbr.rel (%p168) target = $region24
        $region23: #{tpu_custom_call.1} parent=19 // pred_region
          %s171 = sand.u32 %s42, 1
          %s172 = scalar_lea.sflag [#allocation3], %s171
          %s173 = sand.u32 %s42, 1
          %s174 = smul.addr %s173, 64
          %s175 = scalar_lea.vmem [#allocation2], %s174
          %s176 = smul.u32 4, %s26
          %178 = vsyncadd %s172, 0
          %s179 = smul.addr %s176, 2
          %s180 = smul.addr %s25, 8
          %s181 = sadd.s32 %s179, %s180
          %s182 = smul.addr %s181, 8
          %s183 = scalar_lea.hbm %s0, %s182
          %s184 = sshll.u32 %s183, 4
          %s185 = int_to_ptr.hbm [resolvable:$true] %s184
          %s186 = sshll.u32 %s175, 4
          %s187 = int_to_ptr.vmem [resolvable:$true] %s186
          %192 = dma.hbm_to_vmem [thread:$0]  %s185, 1024, %s187, %s172, 128, 128, 8
        $region24: #{tpu_custom_call.1} parent=19 // pred_fallthru
          _
        // Predicated region
        $region25: #{tpu_custom_call.1} parent=19 // pred_check
          %p193 = pneg %p80
        $region26: #{tpu_custom_call.1} parent=19 // pred_check_branch
          %195 = sbr.rel (%p193) target = $region28
        $region27: #{tpu_custom_call.1} parent=19 // pred_region
          %s196 = sand.u32 %s18, 1
          %s197 = scalar_lea.sflag [#allocation6], %s196
          %s198 = sand.u32 %s70, 1
          %s199 = smul.addr %s198, 64
          %s200 = scalar_lea.vmem [#allocation5], %s199
          %s201 = smul.u32 4, %s26
          %203 = vsyncadd %s197, 0
          %s204 = smul.addr %s201, 2
          %s205 = smul.addr %s25, 8
          %s206 = sadd.s32 %s204, %s205
          %s207 = smul.addr %s206, 8
          %s208 = scalar_lea.hbm %s1, %s207
          %s209 = sshll.u32 %s208, 4
          %s210 = int_to_ptr.hbm [resolvable:$true] %s209
          %s211 = sshll.u32 %s200, 4
          %s212 = int_to_ptr.vmem [resolvable:$true] %s211
          %217 = dma.hbm_to_vmem [thread:$0]  %s210, 1024, %s212, %s197, 128, 128, 8
        $region28: #{tpu_custom_call.1} parent=19 // pred_fallthru
          _
      $region20: #{tpu_custom_call.1} parent=5 // pred_fallthru
        _
      %p218 = scmp.le.s32.totalorder 1, %s18
      %p219 = scmp.lt.s32.totalorder %s18, 3
      %p220 = pnand %p218, %p219
      %p221 = pneg %p220
      // Predicated region
      $region29: #{tpu_custom_call.1} parent=5 // pred_check
        _
      $region30: #{tpu_custom_call.1} parent=5 // pred_check_branch
        %223 = sbr.rel (%p220) target = $region32
      $region31: #{tpu_custom_call.1} parent=5 // pred_region
        %s224 = ssub.s32 %s18, 1
        %s225 = sand.u32 %s45, 1
        %s226 = scalar_lea.sflag [#allocation3], %s225
        %s227 = sand.u32 %s45, 1
        %s228 = smul.addr %s227, 64
        %s229 = scalar_lea.vmem [#allocation2], %s228
        // Predicated region
        $region33: #{tpu_custom_call.1} parent=31 // pred_check
          %p230 = pneg %p58
        $region34: #{tpu_custom_call.1} parent=31 // pred_check_branch
          %232 = sbr.rel (%p230) target = $region36
        $region35: #{tpu_custom_call.1} parent=31 // pred_region
          %234 = dma.done %s226, 1024
        $region36: #{tpu_custom_call.1} parent=31 // pred_fallthru
          _
        %s235 = sand.u32 %s23, 1
        %s236 = scalar_lea.sflag [#allocation6], %s235
        %s237 = sand.u32 %s73, 1
        %s238 = smul.addr %s237, 64
        %s239 = scalar_lea.vmem [#allocation5], %s238
        // Predicated region
        $region37: #{tpu_custom_call.1} parent=31 // pred_check
          %p240 = pneg %p86
        $region38: #{tpu_custom_call.1} parent=31 // pred_check_branch
          %242 = sbr.rel (%p240) target = $region40
        $region39: #{tpu_custom_call.1} parent=31 // pred_region
          %244 = dma.done %s236, 1024
        $region40: #{tpu_custom_call.1} parent=31 // pred_fallthru
          _
        // Predicated region
        $region41: #{tpu_custom_call.1} parent=31 // pred_check
          %p245 = pneg %p107
        $region42: #{tpu_custom_call.1} parent=31 // pred_check_branch
          %247 = sbr.rel (%p245) target = $region44
        $region43: #{tpu_custom_call.1} parent=31 // pred_region
          %249 = dma.done [#allocation6], 256
        $region44: #{tpu_custom_call.1} parent=31 // pred_fallthru
          _
        %s250 = sand.u32 %s45, 1
        %s251 = scalar_lea.sflag [#allocation3], %s250
        %s252 = sand.u32 %s45, 1
        %s253 = smul.addr %s252, 64
        %s254 = scalar_lea.vmem [#allocation2], %s253
        %p255 = pneg %p58
        %p256 = pneg %p55
        %s257 = sand.u32 %s23, 1
        %s258 = scalar_lea.sflag [#allocation6], %s257
        %s259 = sand.u32 %s73, 1
        %s260 = smul.addr %s259, 64
        %s261 = scalar_lea.vmem [#allocation5], %s260
        %p262 = pneg %p86
        %p263 = pneg %p83
        %p264 = pneg %p107
        %p265 = pneg %p104
        %p266 = pneg %p135
        %p267 = pneg %p132
        %s268 = sand.u32 %s122, 1
        %s269 = scalar_lea.sflag [#allocation4], %s268
        %s270 = sand.u32 %s122, 1
        %s271 = smul.addr %s270, 64
        %s272 = scalar_lea.vmem [#allocation8], %s271
        %s273 = smul.u32 4, %s28
        %s274 = smul.u32 4, %s28
        %s275 = smul.u32 4, %s28
        %v276 = vld [vmem:[%s229] sm:$0xff]
        %v277 = vld [vmem:[%s229 + $0x8] sm:$0xff]
        %v278 = vld [vmem:[%s229 + $0x10] sm:$0xff]
        %v279 = vld [vmem:[%s229 + $0x18] sm:$0xff]
        %v280 = vld [vmem:[%s229 + $0x20] sm:$0xff]
        %v281 = vld [vmem:[%s229 + $0x28] sm:$0xff]
        %v282 = vld [vmem:[%s229 + $0x30] sm:$0xff]
        %v283 = vld [vmem:[%s229 + $0x38] sm:$0xff]
        %v284 = vld [vmem:[%s239] sm:$0xff]
        %v285 = vld [vmem:[%s239 + $0x8] sm:$0xff]
        %v286 = vld [vmem:[%s239 + $0x10] sm:$0xff]
        %v287 = vld [vmem:[%s239 + $0x18] sm:$0xff]
        %v288 = vld [vmem:[%s239 + $0x20] sm:$0xff]
        %v289 = vld [vmem:[%s239 + $0x28] sm:$0xff]
        %v290 = vld [vmem:[%s239 + $0x30] sm:$0xff]
        %v291 = vld [vmem:[%s239 + $0x38] sm:$0xff]
        %v292 = vld [vmem:[#allocation7] sm:$0xff]
        %v293 = vld [vmem:[#allocation7 + $0x8] sm:$0xff]
        %v294 = vlaneseq
        %v295 = vand.u32 %v294, 127
        %vm296 = vcmp.le.s32.totalorder %v295, 14
        %v297 = vsel %vm296, 1, 0
        %v298 = vcvt.s32.f32 %v297
        %vm299 = vcmp.le.s32.totalorder %v295, 13
        %v300 = vsel %vm299, 1, 0
        %v301 = vcvt.s32.f32 %v300
        %vm302 = vcmp.ge.s32.totalorder %v295, 1
        %v303 = vsel %vm302, 1, 0
        %v304 = vcvt.s32.f32 %v303
        %vm305 = vcmp.ge.s32.totalorder %v295, 2
        %v306 = vsel %vm305, 1, 0
        %v307 = vcvt.s32.f32 %v306
        %v308 = vmul.f32 %v276, %v284
        %v309 = vmul.f32 %v277, %v285
        %v310 = vmul.f32 %v278, %v286
        %v311 = vmul.f32 %v279, %v287
        %v312 = vmul.f32 %v280, %v288
        %v313 = vmul.f32 %v281, %v289
        %v314 = vmul.f32 %v282, %v290
        %v315 = vmul.f32 %v283, %v291
        %v316 = vmul.f32 %v276, %v276
        %v317 = vmul.f32 %v277, %v277
        %v318 = vmul.f32 %v278, %v278
        %v319 = vmul.f32 %v279, %v279
        %v320 = vmul.f32 %v280, %v280
        %v321 = vmul.f32 %v281, %v281
        %v322 = vmul.f32 %v282, %v282
        %v323 = vmul.f32 %v283, %v283
        %324 = vrot.lane.b32.xlu0 %v276, 127
        %v325 = vpop.permute.xlu0 %324
        %326 = vrot.lane.b32.xlu0 %v277, 127
        %v327 = vpop.permute.xlu0 %326
        %328 = vrot.lane.b32.xlu0 %v278, 127
        %v329 = vpop.permute.xlu0 %328
        %330 = vrot.lane.b32.xlu0 %v279, 127
        %v331 = vpop.permute.xlu0 %330
        %332 = vrot.lane.b32.xlu0 %v280, 127
        %v333 = vpop.permute.xlu0 %332
        %334 = vrot.lane.b32.xlu0 %v281, 127
        %v335 = vpop.permute.xlu0 %334
        %336 = vrot.lane.b32.xlu0 %v282, 127
        %v337 = vpop.permute.xlu0 %336
        %338 = vrot.lane.b32.xlu0 %v283, 127
        %v339 = vpop.permute.xlu0 %338
        %v340 = vmul.f32 %v298, %v325
        %v341 = vmul.f32 %v298, %v327
        %v342 = vmul.f32 %v298, %v329
        %v343 = vmul.f32 %v298, %v331
        %v344 = vmul.f32 %v298, %v333
        %v345 = vmul.f32 %v298, %v335
        %v346 = vmul.f32 %v298, %v337
        %v347 = vmul.f32 %v298, %v339
        %v348 = vadd.f32 %v276, %v340
        %v349 = vadd.f32 %v277, %v341
        %v350 = vadd.f32 %v278, %v342
        %v351 = vadd.f32 %v279, %v343
        %v352 = vadd.f32 %v280, %v344
        %v353 = vadd.f32 %v281, %v345
        %v354 = vadd.f32 %v282, %v346
        %v355 = vadd.f32 %v283, %v347
        %356 = vrot.lane.b32.xlu0 %v276, 1
        %v357 = vpop.permute.xlu0 %356
        %358 = vrot.lane.b32.xlu0 %v277, 1
        %v359 = vpop.permute.xlu0 %358
        %360 = vrot.lane.b32.xlu0 %v278, 1
        %v361 = vpop.permute.xlu0 %360
        %362 = vrot.lane.b32.xlu0 %v279, 1
        %v363 = vpop.permute.xlu0 %362
        %364 = vrot.lane.b32.xlu0 %v280, 1
        %v365 = vpop.permute.xlu0 %364
        %366 = vrot.lane.b32.xlu0 %v281, 1
        %v367 = vpop.permute.xlu0 %366
        %368 = vrot.lane.b32.xlu0 %v282, 1
        %v369 = vpop.permute.xlu0 %368
        %370 = vrot.lane.b32.xlu0 %v283, 1
        %v371 = vpop.permute.xlu0 %370
        %v372 = vmul.f32 %v304, %v357
        %v373 = vmul.f32 %v304, %v359
        %v374 = vmul.f32 %v304, %v361
        %v375 = vmul.f32 %v304, %v363
        %v376 = vmul.f32 %v304, %v365
        %v377 = vmul.f32 %v304, %v367
        %v378 = vmul.f32 %v304, %v369
        %v379 = vmul.f32 %v304, %v371
        %v380 = vadd.f32 %v348, %v372
        %v381 = vadd.f32 %v349, %v373
        %v382 = vadd.f32 %v350, %v374
        %v383 = vadd.f32 %v351, %v375
        %v384 = vadd.f32 %v352, %v376
        %v385 = vadd.f32 %v353, %v377
        %v386 = vadd.f32 %v354, %v378
        %v387 = vadd.f32 %v355, %v379
        %388 = vrot.lane.b32.xlu0 %v276, 126
        %v389 = vpop.permute.xlu0 %388
        %390 = vrot.lane.b32.xlu0 %v277, 126
        %v391 = vpop.permute.xlu0 %390
        %392 = vrot.lane.b32.xlu0 %v278, 126
        %v393 = vpop.permute.xlu0 %392
        %394 = vrot.lane.b32.xlu0 %v279, 126
        %v395 = vpop.permute.xlu0 %394
        %396 = vrot.lane.b32.xlu0 %v280, 126
        %v397 = vpop.permute.xlu0 %396
        %398 = vrot.lane.b32.xlu0 %v281, 126
        %v399 = vpop.permute.xlu0 %398
        %400 = vrot.lane.b32.xlu0 %v282, 126
        %v401 = vpop.permute.xlu0 %400
        %402 = vrot.lane.b32.xlu0 %v283, 126
        %v403 = vpop.permute.xlu0 %402
        %v404 = vmul.f32 %v301, %v389
        %v405 = vmul.f32 %v301, %v391
        %v406 = vmul.f32 %v301, %v393
        %v407 = vmul.f32 %v301, %v395
        %v408 = vmul.f32 %v301, %v397
        %v409 = vmul.f32 %v301, %v399
        %v410 = vmul.f32 %v301, %v401
        %v411 = vmul.f32 %v301, %v403
        %v412 = vadd.f32 %v380, %v404
        %v413 = vadd.f32 %v381, %v405
        %v414 = vadd.f32 %v382, %v406
        %v415 = vadd.f32 %v383, %v407
        %v416 = vadd.f32 %v384, %v408
        %v417 = vadd.f32 %v385, %v409
        %v418 = vadd.f32 %v386, %v410
        %v419 = vadd.f32 %v387, %v411
        %420 = vrot.lane.b32.xlu0 %v276, 2
        %v421 = vpop.permute.xlu0 %420
        %422 = vrot.lane.b32.xlu0 %v277, 2
        %v423 = vpop.permute.xlu0 %422
        %424 = vrot.lane.b32.xlu0 %v278, 2
        %v425 = vpop.permute.xlu0 %424
        %426 = vrot.lane.b32.xlu0 %v279, 2
        %v427 = vpop.permute.xlu0 %426
        %428 = vrot.lane.b32.xlu0 %v280, 2
        %v429 = vpop.permute.xlu0 %428
        %430 = vrot.lane.b32.xlu0 %v281, 2
        %v431 = vpop.permute.xlu0 %430
        %432 = vrot.lane.b32.xlu0 %v282, 2
        %v433 = vpop.permute.xlu0 %432
        %434 = vrot.lane.b32.xlu0 %v283, 2
        %v435 = vpop.permute.xlu0 %434
        %v436 = vmul.f32 %v307, %v421
        %v437 = vmul.f32 %v307, %v423
        %v438 = vmul.f32 %v307, %v425
        %v439 = vmul.f32 %v307, %v427
        %v440 = vmul.f32 %v307, %v429
        %v441 = vmul.f32 %v307, %v431
        %v442 = vmul.f32 %v307, %v433
        %v443 = vmul.f32 %v307, %v435
        %v444 = vadd.f32 %v412, %v436
        %v445 = vadd.f32 %v413, %v437
        %v446 = vadd.f32 %v414, %v438
        %v447 = vadd.f32 %v415, %v439
        %v448 = vadd.f32 %v416, %v440
        %v449 = vadd.f32 %v417, %v441
        %v450 = vadd.f32 %v418, %v442
        %v451 = vadd.f32 %v419, %v443
        %v452 = vlaneseq
        %v453 = vshrl.u32 %v452, 7
        %v454 = vadd.s32 %v453, 8
        %vm455 = vcmp.le.s32.totalorder %v453, 14
        %vm456 = vcmp.le.s32.totalorder %v454, 14
        %vm457 = vcmp.ge.s32.totalorder %v453, 1
        %vm458 = vcmp.ge.s32.totalorder %v454, 1
        %v459 = vsel %vm455, 1, 0
        %v460 = vsel %vm456, 1, 0
        %v461 = vcvt.s32.f32 %v459
        %v462 = vcvt.s32.f32 %v460
        %v463 = vsel %vm457, 1, 0
        %v464 = vsel %vm458, 1, 0
        %v465 = vcvt.s32.f32 %v463
        %v466 = vcvt.s32.f32 %v464
        %vm467 = vcmp.le.s32.totalorder %v453, 13
        %vm468 = vcmp.le.s32.totalorder %v454, 13
        %vm469 = vcmp.ge.s32.totalorder %v453, 2
        %vm470 = vcmp.ge.s32.totalorder %v454, 2
        %v471 = vsel %vm467, 1, 0
        %v472 = vsel %vm468, 1, 0
        %v473 = vcvt.s32.f32 %v471
        %v474 = vcvt.s32.f32 %v472
        %v475 = vsel %vm469, 1, 0
        %v476 = vsel %vm470, 1, 0
        %v477 = vcvt.s32.f32 %v475
        %v478 = vcvt.s32.f32 %v476
        %v479 = vrot.slane %v444, 1
        %v480 = vrot.slane %v445, 1
        %v481 = vrot.slane %v446, 1
        %v482 = vrot.slane %v447, 1
        %v483 = vrot.slane %v448, 1
        %v484 = vrot.slane %v449, 1
        %v485 = vrot.slane %v450, 1
        %v486 = vrot.slane %v451, 1
        %vm487 = vcmp.lt.s32.totalorder %v453, 7
        %v488 = vsel %vm487, %v485, %v486
        %v489 = vsel %vm487, %v484, %v485
        %v490 = vsel %vm487, %v483, %v484
        %v491 = vsel %vm487, %v482, %v483
        %v492 = vsel %vm487, %v481, %v482
        %v493 = vsel %vm487, %v480, %v481
        %v494 = vsel %vm487, %v479, %v480
        %v495 = vsel %vm487, %v486, %v479
        %v496 = vmul.f32 %v461, %v494
        %v497 = vmul.f32 %v462, %v493
        %v498 = vmul.f32 %v461, %v492
        %v499 = vmul.f32 %v462, %v491
        %v500 = vmul.f32 %v461, %v490
        %v501 = vmul.f32 %v462, %v489
        %v502 = vmul.f32 %v461, %v488
        %v503 = vmul.f32 %v462, %v495
        %v504 = vadd.f32 %v444, %v496
        %v505 = vadd.f32 %v445, %v497
        %v506 = vadd.f32 %v446, %v498
        %v507 = vadd.f32 %v447, %v499
        %v508 = vadd.f32 %v448, %v500
        %v509 = vadd.f32 %v449, %v501
        %v510 = vadd.f32 %v450, %v502
        %v511 = vadd.f32 %v451, %v503
        %v512 = vrot.slane %v444, 7
        %v513 = vrot.slane %v445, 7
        %v514 = vrot.slane %v446, 7
        %v515 = vrot.slane %v447, 7
        %v516 = vrot.slane %v448, 7
        %v517 = vrot.slane %v449, 7
        %v518 = vrot.slane %v450, 7
        %v519 = vrot.slane %v451, 7
        %vm520 = vcmp.lt.s32.totalorder %v453, 1
        %v521 = vsel %vm520, %v518, %v519
        %v522 = vsel %vm520, %v517, %v518
        %v523 = vsel %vm520, %v516, %v517
        %v524 = vsel %vm520, %v515, %v516
        %v525 = vsel %vm520, %v514, %v515
        %v526 = vsel %vm520, %v513, %v514
        %v527 = vsel %vm520, %v512, %v513
        %v528 = vsel %vm520, %v519, %v512
        %v529 = vmul.f32 %v465, %v528
        %v530 = vmul.f32 %v466, %v527
        %v531 = vmul.f32 %v465, %v526
        %v532 = vmul.f32 %v466, %v525
        %v533 = vmul.f32 %v465, %v524
        %v534 = vmul.f32 %v466, %v523
        %v535 = vmul.f32 %v465, %v522
        %v536 = vmul.f32 %v466, %v521
        %v537 = vadd.f32 %v504, %v529
        %v538 = vadd.f32 %v505, %v530
        %v539 = vadd.f32 %v506, %v531
        %v540 = vadd.f32 %v507, %v532
        %v541 = vadd.f32 %v508, %v533
        %v542 = vadd.f32 %v509, %v534
        %v543 = vadd.f32 %v510, %v535
        %v544 = vadd.f32 %v511, %v536
        %v545 = vrot.slane %v444, 2
        %v546 = vrot.slane %v445, 2
        %v547 = vrot.slane %v446, 2
        %v548 = vrot.slane %v447, 2
        %v549 = vrot.slane %v448, 2
        %v550 = vrot.slane %v449, 2
        %v551 = vrot.slane %v450, 2
        %v552 = vrot.slane %v451, 2
        %vm553 = vcmp.lt.s32.totalorder %v453, 6
        %v554 = vsel %vm553, %v551, %v552
        %v555 = vsel %vm553, %v550, %v551
        %v556 = vsel %vm553, %v549, %v550
        %v557 = vsel %vm553, %v548, %v549
        %v558 = vsel %vm553, %v547, %v548
        %v559 = vsel %vm553, %v546, %v547
        %v560 = vsel %vm553, %v545, %v546
        %v561 = vsel %vm553, %v552, %v545
        %v562 = vmul.f32 %v473, %v560
        %v563 = vmul.f32 %v474, %v559
        %v564 = vmul.f32 %v473, %v558
        %v565 = vmul.f32 %v474, %v557
        %v566 = vmul.f32 %v473, %v556
        %v567 = vmul.f32 %v474, %v555
        %v568 = vmul.f32 %v473, %v554
        %v569 = vmul.f32 %v474, %v561
        %v570 = vadd.f32 %v537, %v562
        %v571 = vadd.f32 %v538, %v563
        %v572 = vadd.f32 %v539, %v564
        %v573 = vadd.f32 %v540, %v565
        %v574 = vadd.f32 %v541, %v566
        %v575 = vadd.f32 %v542, %v567
        %v576 = vadd.f32 %v543, %v568
        %v577 = vadd.f32 %v544, %v569
        %v578 = vrot.slane %v444, 6
        %v579 = vrot.slane %v445, 6
        %v580 = vrot.slane %v446, 6
        %v581 = vrot.slane %v447, 6
        %v582 = vrot.slane %v448, 6
        %v583 = vrot.slane %v449, 6
        %v584 = vrot.slane %v450, 6
        %v585 = vrot.slane %v451, 6
        %vm586 = vcmp.lt.s32.totalorder %v453, 2
        %v587 = vsel %vm586, %v584, %v585
        %v588 = vsel %vm586, %v583, %v584
        %v589 = vsel %vm586, %v582, %v583
        %v590 = vsel %vm586, %v581, %v582
        %v591 = vsel %vm586, %v580, %v581
        %v592 = vsel %vm586, %v579, %v580
        %v593 = vsel %vm586, %v578, %v579
        %v594 = vsel %vm586, %v585, %v578
        %v595 = vmul.f32 %v477, %v594
        %v596 = vmul.f32 %v478, %v593
        %v597 = vmul.f32 %v477, %v592
        %v598 = vmul.f32 %v478, %v591
        %v599 = vmul.f32 %v477, %v590
        %v600 = vmul.f32 %v478, %v589
        %v601 = vmul.f32 %v477, %v588
        %v602 = vmul.f32 %v478, %v587
        %v603 = vadd.f32 %v570, %v595
        %v604 = vadd.f32 %v571, %v596
        %v605 = vadd.f32 %v572, %v597
        %v606 = vadd.f32 %v573, %v598
        %v607 = vadd.f32 %v574, %v599
        %v608 = vadd.f32 %v575, %v600
        %v609 = vadd.f32 %v576, %v601
        %v610 = vadd.f32 %v577, %v602
        %611 = vrot.lane.b32.xlu0 %v316, 127
        %v612 = vpop.permute.xlu0 %611
        %613 = vrot.lane.b32.xlu0 %v317, 127
        %v614 = vpop.permute.xlu0 %613
        %615 = vrot.lane.b32.xlu0 %v318, 127
        %v616 = vpop.permute.xlu0 %615
        %617 = vrot.lane.b32.xlu0 %v319, 127
        %v618 = vpop.permute.xlu0 %617
        %619 = vrot.lane.b32.xlu0 %v320, 127
        %v620 = vpop.permute.xlu0 %619
        %621 = vrot.lane.b32.xlu0 %v321, 127
        %v622 = vpop.permute.xlu0 %621
        %623 = vrot.lane.b32.xlu0 %v322, 127
        %v624 = vpop.permute.xlu0 %623
        %625 = vrot.lane.b32.xlu0 %v323, 127
        %v626 = vpop.permute.xlu0 %625
        %v627 = vmul.f32 %v298, %v612
        %v628 = vmul.f32 %v298, %v614
        %v629 = vmul.f32 %v298, %v616
        %v630 = vmul.f32 %v298, %v618
        %v631 = vmul.f32 %v298, %v620
        %v632 = vmul.f32 %v298, %v622
        %v633 = vmul.f32 %v298, %v624
        %v634 = vmul.f32 %v298, %v626
        %v635 = vadd.f32 %v316, %v627
        %v636 = vadd.f32 %v317, %v628
        %v637 = vadd.f32 %v318, %v629
        %v638 = vadd.f32 %v319, %v630
        %v639 = vadd.f32 %v320, %v631
        %v640 = vadd.f32 %v321, %v632
        %v641 = vadd.f32 %v322, %v633
        %v642 = vadd.f32 %v323, %v634
        %643 = vrot.lane.b32.xlu0 %v316, 1
        %v644 = vpop.permute.xlu0 %643
        %645 = vrot.lane.b32.xlu0 %v317, 1
        %v646 = vpop.permute.xlu0 %645
        %647 = vrot.lane.b32.xlu0 %v318, 1
        %v648 = vpop.permute.xlu0 %647
        %649 = vrot.lane.b32.xlu0 %v319, 1
        %v650 = vpop.permute.xlu0 %649
        %651 = vrot.lane.b32.xlu0 %v320, 1
        %v652 = vpop.permute.xlu0 %651
        %653 = vrot.lane.b32.xlu0 %v321, 1
        %v654 = vpop.permute.xlu0 %653
        %655 = vrot.lane.b32.xlu0 %v322, 1
        %v656 = vpop.permute.xlu0 %655
        %657 = vrot.lane.b32.xlu0 %v323, 1
        %v658 = vpop.permute.xlu0 %657
        %v659 = vmul.f32 %v304, %v644
        %v660 = vmul.f32 %v304, %v646
        %v661 = vmul.f32 %v304, %v648
        %v662 = vmul.f32 %v304, %v650
        %v663 = vmul.f32 %v304, %v652
        %v664 = vmul.f32 %v304, %v654
        %v665 = vmul.f32 %v304, %v656
        %v666 = vmul.f32 %v304, %v658
        %v667 = vadd.f32 %v635, %v659
        %v668 = vadd.f32 %v636, %v660
        %v669 = vadd.f32 %v637, %v661
        %v670 = vadd.f32 %v638, %v662
        %v671 = vadd.f32 %v639, %v663
        %v672 = vadd.f32 %v640, %v664
        %v673 = vadd.f32 %v641, %v665
        %v674 = vadd.f32 %v642, %v666
        %675 = vrot.lane.b32.xlu0 %v316, 126
        %v676 = vpop.permute.xlu0 %675
        %677 = vrot.lane.b32.xlu0 %v317, 126
        %v678 = vpop.permute.xlu0 %677
        %679 = vrot.lane.b32.xlu0 %v318, 126
        %v680 = vpop.permute.xlu0 %679
        %681 = vrot.lane.b32.xlu0 %v319, 126
        %v682 = vpop.permute.xlu0 %681
        %683 = vrot.lane.b32.xlu0 %v320, 126
        %v684 = vpop.permute.xlu0 %683
        %685 = vrot.lane.b32.xlu0 %v321, 126
        %v686 = vpop.permute.xlu0 %685
        %687 = vrot.lane.b32.xlu0 %v322, 126
        %v688 = vpop.permute.xlu0 %687
        %689 = vrot.lane.b32.xlu0 %v323, 126
        %v690 = vpop.permute.xlu0 %689
        %v691 = vmul.f32 %v301, %v676
        %v692 = vmul.f32 %v301, %v678
        %v693 = vmul.f32 %v301, %v680
        %v694 = vmul.f32 %v301, %v682
        %v695 = vmul.f32 %v301, %v684
        %v696 = vmul.f32 %v301, %v686
        %v697 = vmul.f32 %v301, %v688
        %v698 = vmul.f32 %v301, %v690
        %v699 = vadd.f32 %v667, %v691
        %v700 = vadd.f32 %v668, %v692
        %v701 = vadd.f32 %v669, %v693
        %v702 = vadd.f32 %v670, %v694
        %v703 = vadd.f32 %v671, %v695
        %v704 = vadd.f32 %v672, %v696
        %v705 = vadd.f32 %v673, %v697
        %v706 = vadd.f32 %v674, %v698
        %707 = vrot.lane.b32.xlu0 %v316, 2
        %v708 = vpop.permute.xlu0 %707
        %709 = vrot.lane.b32.xlu0 %v317, 2
        %v710 = vpop.permute.xlu0 %709
        %711 = vrot.lane.b32.xlu0 %v318, 2
        %v712 = vpop.permute.xlu0 %711
        %713 = vrot.lane.b32.xlu0 %v319, 2
        %v714 = vpop.permute.xlu0 %713
        %715 = vrot.lane.b32.xlu0 %v320, 2
        %v716 = vpop.permute.xlu0 %715
        %717 = vrot.lane.b32.xlu0 %v321, 2
        %v718 = vpop.permute.xlu0 %717
        %719 = vrot.lane.b32.xlu0 %v322, 2
        %v720 = vpop.permute.xlu0 %719
        %721 = vrot.lane.b32.xlu0 %v323, 2
        %v722 = vpop.permute.xlu0 %721
        %v723 = vmul.f32 %v307, %v708
        %v724 = vmul.f32 %v307, %v710
        %v725 = vmul.f32 %v307, %v712
        %v726 = vmul.f32 %v307, %v714
        %v727 = vmul.f32 %v307, %v716
        %v728 = vmul.f32 %v307, %v718
        %v729 = vmul.f32 %v307, %v720
        %v730 = vmul.f32 %v307, %v722
        %v731 = vadd.f32 %v699, %v723
        %v732 = vadd.f32 %v700, %v724
        %v733 = vadd.f32 %v701, %v725
        %v734 = vadd.f32 %v702, %v726
        %v735 = vadd.f32 %v703, %v727
        %v736 = vadd.f32 %v704, %v728
        %v737 = vadd.f32 %v705, %v729
        %v738 = vadd.f32 %v706, %v730
        %v739 = vrot.slane %v731, 1
        %v740 = vrot.slane %v732, 1
        %v741 = vrot.slane %v733, 1
        %v742 = vrot.slane %v734, 1
        %v743 = vrot.slane %v735, 1
        %v744 = vrot.slane %v736, 1
        %v745 = vrot.slane %v737, 1
        %v746 = vrot.slane %v738, 1
        %v747 = vsel %vm487, %v745, %v746
        %v748 = vsel %vm487, %v744, %v745
        %v749 = vsel %vm487, %v743, %v744
        %v750 = vsel %vm487, %v742, %v743
        %v751 = vsel %vm487, %v741, %v742
        %v752 = vsel %vm487, %v740, %v741
        %v753 = vsel %vm487, %v739, %v740
        %v754 = vsel %vm487, %v746, %v739
        %v755 = vmul.f32 %v461, %v753
        %v756 = vmul.f32 %v462, %v752
        %v757 = vmul.f32 %v461, %v751
        %v758 = vmul.f32 %v462, %v750
        %v759 = vmul.f32 %v461, %v749
        %v760 = vmul.f32 %v462, %v748
        %v761 = vmul.f32 %v461, %v747
        %v762 = vmul.f32 %v462, %v754
        %v763 = vadd.f32 %v731, %v755
        %v764 = vadd.f32 %v732, %v756
        %v765 = vadd.f32 %v733, %v757
        %v766 = vadd.f32 %v734, %v758
        %v767 = vadd.f32 %v735, %v759
        %v768 = vadd.f32 %v736, %v760
        %v769 = vadd.f32 %v737, %v761
        %v770 = vadd.f32 %v738, %v762
        %v771 = vrot.slane %v731, 7
        %v772 = vrot.slane %v732, 7
        %v773 = vrot.slane %v733, 7
        %v774 = vrot.slane %v734, 7
        %v775 = vrot.slane %v735, 7
        %v776 = vrot.slane %v736, 7
        %v777 = vrot.slane %v737, 7
        %v778 = vrot.slane %v738, 7
        %v779 = vsel %vm520, %v777, %v778
        %v780 = vsel %vm520, %v776, %v777
        %v781 = vsel %vm520, %v775, %v776
        %v782 = vsel %vm520, %v774, %v775
        %v783 = vsel %vm520, %v773, %v774
        %v784 = vsel %vm520, %v772, %v773
        %v785 = vsel %vm520, %v771, %v772
        %v786 = vsel %vm520, %v778, %v771
        %v787 = vmul.f32 %v465, %v786
        %v788 = vmul.f32 %v466, %v785
        %v789 = vmul.f32 %v465, %v784
        %v790 = vmul.f32 %v466, %v783
        %v791 = vmul.f32 %v465, %v782
        %v792 = vmul.f32 %v466, %v781
        %v793 = vmul.f32 %v465, %v780
        %v794 = vmul.f32 %v466, %v779
        %v795 = vadd.f32 %v763, %v787
        %v796 = vadd.f32 %v764, %v788
        %v797 = vadd.f32 %v765, %v789
        %v798 = vadd.f32 %v766, %v790
        %v799 = vadd.f32 %v767, %v791
        %v800 = vadd.f32 %v768, %v792
        %v801 = vadd.f32 %v769, %v793
        %v802 = vadd.f32 %v770, %v794
        %v803 = vrot.slane %v731, 2
        %v804 = vrot.slane %v732, 2
        %v805 = vrot.slane %v733, 2
        %v806 = vrot.slane %v734, 2
        %v807 = vrot.slane %v735, 2
        %v808 = vrot.slane %v736, 2
        %v809 = vrot.slane %v737, 2
        %v810 = vrot.slane %v738, 2
        %v811 = vsel %vm553, %v809, %v810
        %v812 = vsel %vm553, %v808, %v809
        %v813 = vsel %vm553, %v807, %v808
        %v814 = vsel %vm553, %v806, %v807
        %v815 = vsel %vm553, %v805, %v806
        %v816 = vsel %vm553, %v804, %v805
        %v817 = vsel %vm553, %v803, %v804
        %v818 = vsel %vm553, %v810, %v803
        %v819 = vmul.f32 %v473, %v817
        %v820 = vmul.f32 %v474, %v816
        %v821 = vmul.f32 %v473, %v815
        %v822 = vmul.f32 %v474, %v814
        %v823 = vmul.f32 %v473, %v813
        %v824 = vmul.f32 %v474, %v812
        %v825 = vmul.f32 %v473, %v811
        %v826 = vmul.f32 %v474, %v818
        %v827 = vadd.f32 %v795, %v819
        %v828 = vadd.f32 %v796, %v820
        %v829 = vadd.f32 %v797, %v821
        %v830 = vadd.f32 %v798, %v822
        %v831 = vadd.f32 %v799, %v823
        %v832 = vadd.f32 %v800, %v824
        %v833 = vadd.f32 %v801, %v825
        %v834 = vadd.f32 %v802, %v826
        %v835 = vrot.slane %v731, 6
        %v836 = vrot.slane %v732, 6
        %v837 = vrot.slane %v733, 6
        %v838 = vrot.slane %v734, 6
        %v839 = vrot.slane %v735, 6
        %v840 = vrot.slane %v736, 6
        %v841 = vrot.slane %v737, 6
        %v842 = vrot.slane %v738, 6
        %v843 = vsel %vm586, %v841, %v842
        %v844 = vsel %vm586, %v840, %v841
        %v845 = vsel %vm586, %v839, %v840
        %v846 = vsel %vm586, %v838, %v839
        %v847 = vsel %vm586, %v837, %v838
        %v848 = vsel %vm586, %v836, %v837
        %v849 = vsel %vm586, %v835, %v836
        %v850 = vsel %vm586, %v842, %v835
        %v851 = vmul.f32 %v477, %v850
        %v852 = vmul.f32 %v478, %v849
        %v853 = vmul.f32 %v477, %v848
        %v854 = vmul.f32 %v478, %v847
        %v855 = vmul.f32 %v477, %v846
        %v856 = vmul.f32 %v478, %v845
        %v857 = vmul.f32 %v477, %v844
        %v858 = vmul.f32 %v478, %v843
        %v859 = vadd.f32 %v827, %v851
        %v860 = vadd.f32 %v828, %v852
        %v861 = vadd.f32 %v829, %v853
        %v862 = vadd.f32 %v830, %v854
        %v863 = vadd.f32 %v831, %v855
        %v864 = vadd.f32 %v832, %v856
        %v865 = vadd.f32 %v833, %v857
        %v866 = vadd.f32 %v834, %v858
        %867 = vrot.lane.b32.xlu0 %v308, 127
        %v868 = vpop.permute.xlu0 %867
        %869 = vrot.lane.b32.xlu0 %v309, 127
        %v870 = vpop.permute.xlu0 %869
        %871 = vrot.lane.b32.xlu0 %v310, 127
        %v872 = vpop.permute.xlu0 %871
        %873 = vrot.lane.b32.xlu0 %v311, 127
        %v874 = vpop.permute.xlu0 %873
        %875 = vrot.lane.b32.xlu0 %v312, 127
        %v876 = vpop.permute.xlu0 %875
        %877 = vrot.lane.b32.xlu0 %v313, 127
        %v878 = vpop.permute.xlu0 %877
        %879 = vrot.lane.b32.xlu0 %v314, 127
        %v880 = vpop.permute.xlu0 %879
        %881 = vrot.lane.b32.xlu0 %v315, 127
        %v882 = vpop.permute.xlu0 %881
        %v883 = vmul.f32 %v298, %v868
        %v884 = vmul.f32 %v298, %v870
        %v885 = vmul.f32 %v298, %v872
        %v886 = vmul.f32 %v298, %v874
        %v887 = vmul.f32 %v298, %v876
        %v888 = vmul.f32 %v298, %v878
        %v889 = vmul.f32 %v298, %v880
        %v890 = vmul.f32 %v298, %v882
        %v891 = vadd.f32 %v308, %v883
        %v892 = vadd.f32 %v309, %v884
        %v893 = vadd.f32 %v310, %v885
        %v894 = vadd.f32 %v311, %v886
        %v895 = vadd.f32 %v312, %v887
        %v896 = vadd.f32 %v313, %v888
        %v897 = vadd.f32 %v314, %v889
        %v898 = vadd.f32 %v315, %v890
        %899 = vrot.lane.b32.xlu0 %v308, 1
        %v900 = vpop.permute.xlu0 %899
        %901 = vrot.lane.b32.xlu0 %v309, 1
        %v902 = vpop.permute.xlu0 %901
        %903 = vrot.lane.b32.xlu0 %v310, 1
        %v904 = vpop.permute.xlu0 %903
        %905 = vrot.lane.b32.xlu0 %v311, 1
        %v906 = vpop.permute.xlu0 %905
        %907 = vrot.lane.b32.xlu0 %v312, 1
        %v908 = vpop.permute.xlu0 %907
        %909 = vrot.lane.b32.xlu0 %v313, 1
        %v910 = vpop.permute.xlu0 %909
        %911 = vrot.lane.b32.xlu0 %v314, 1
        %v912 = vpop.permute.xlu0 %911
        %913 = vrot.lane.b32.xlu0 %v315, 1
        %v914 = vpop.permute.xlu0 %913
        %v915 = vmul.f32 %v304, %v900
        %v916 = vmul.f32 %v304, %v902
        %v917 = vmul.f32 %v304, %v904
        %v918 = vmul.f32 %v304, %v906
        %v919 = vmul.f32 %v304, %v908
        %v920 = vmul.f32 %v304, %v910
        %v921 = vmul.f32 %v304, %v912
        %v922 = vmul.f32 %v304, %v914
        %v923 = vadd.f32 %v891, %v915
        %v924 = vadd.f32 %v892, %v916
        %v925 = vadd.f32 %v893, %v917
        %v926 = vadd.f32 %v894, %v918
        %v927 = vadd.f32 %v895, %v919
        %v928 = vadd.f32 %v896, %v920
        %v929 = vadd.f32 %v897, %v921
        %v930 = vadd.f32 %v898, %v922
        %931 = vrot.lane.b32.xlu0 %v308, 126
        %v932 = vpop.permute.xlu0 %931
        %933 = vrot.lane.b32.xlu0 %v309, 126
        %v934 = vpop.permute.xlu0 %933
        %935 = vrot.lane.b32.xlu0 %v310, 126
        %v936 = vpop.permute.xlu0 %935
        %937 = vrot.lane.b32.xlu0 %v311, 126
        %v938 = vpop.permute.xlu0 %937
        %939 = vrot.lane.b32.xlu0 %v312, 126
        %v940 = vpop.permute.xlu0 %939
        %941 = vrot.lane.b32.xlu0 %v313, 126
        %v942 = vpop.permute.xlu0 %941
        %943 = vrot.lane.b32.xlu0 %v314, 126
        %v944 = vpop.permute.xlu0 %943
        %945 = vrot.lane.b32.xlu0 %v315, 126
        %v946 = vpop.permute.xlu0 %945
        %v947 = vmul.f32 %v301, %v932
        %v948 = vmul.f32 %v301, %v934
        %v949 = vmul.f32 %v301, %v936
        %v950 = vmul.f32 %v301, %v938
        %v951 = vmul.f32 %v301, %v940
        %v952 = vmul.f32 %v301, %v942
        %v953 = vmul.f32 %v301, %v944
        %v954 = vmul.f32 %v301, %v946
        %v955 = vadd.f32 %v923, %v947
        %v956 = vadd.f32 %v924, %v948
        %v957 = vadd.f32 %v925, %v949
        %v958 = vadd.f32 %v926, %v950
        %v959 = vadd.f32 %v927, %v951
        %v960 = vadd.f32 %v928, %v952
        %v961 = vadd.f32 %v929, %v953
        %v962 = vadd.f32 %v930, %v954
        %963 = vrot.lane.b32.xlu0 %v308, 2
        %v964 = vpop.permute.xlu0 %963
        %965 = vrot.lane.b32.xlu0 %v309, 2
        %v966 = vpop.permute.xlu0 %965
        %967 = vrot.lane.b32.xlu0 %v310, 2
        %v968 = vpop.permute.xlu0 %967
        %969 = vrot.lane.b32.xlu0 %v311, 2
        %v970 = vpop.permute.xlu0 %969
        %971 = vrot.lane.b32.xlu0 %v312, 2
        %v972 = vpop.permute.xlu0 %971
        %973 = vrot.lane.b32.xlu0 %v313, 2
        %v974 = vpop.permute.xlu0 %973
        %975 = vrot.lane.b32.xlu0 %v314, 2
        %v976 = vpop.permute.xlu0 %975
        %977 = vrot.lane.b32.xlu0 %v315, 2
        %v978 = vpop.permute.xlu0 %977
        %v979 = vmul.f32 %v307, %v964
        %v980 = vmul.f32 %v307, %v966
        %v981 = vmul.f32 %v307, %v968
        %v982 = vmul.f32 %v307, %v970
        %v983 = vmul.f32 %v307, %v972
        %v984 = vmul.f32 %v307, %v974
        %v985 = vmul.f32 %v307, %v976
        %v986 = vmul.f32 %v307, %v978
        %v987 = vadd.f32 %v955, %v979
        %v988 = vadd.f32 %v956, %v980
        %v989 = vadd.f32 %v957, %v981
        %v990 = vadd.f32 %v958, %v982
        %v991 = vadd.f32 %v959, %v983
        %v992 = vadd.f32 %v960, %v984
        %v993 = vadd.f32 %v961, %v985
        %v994 = vadd.f32 %v962, %v986
        %v995 = vrot.slane %v987, 1
        %v996 = vrot.slane %v988, 1
        %v997 = vrot.slane %v989, 1
        %v998 = vrot.slane %v990, 1
        %v999 = vrot.slane %v991, 1
        %v1000 = vrot.slane %v992, 1
        %v1001 = vrot.slane %v993, 1
        %v1002 = vrot.slane %v994, 1
        %v1003 = vsel %vm487, %v1001, %v1002
        %v1004 = vsel %vm487, %v1000, %v1001
        %v1005 = vsel %vm487, %v999, %v1000
        %v1006 = vsel %vm487, %v998, %v999
        %v1007 = vsel %vm487, %v997, %v998
        %v1008 = vsel %vm487, %v996, %v997
        %v1009 = vsel %vm487, %v995, %v996
        %v1010 = vsel %vm487, %v1002, %v995
        %v1011 = vmul.f32 %v461, %v1009
        %v1012 = vmul.f32 %v462, %v1008
        %v1013 = vmul.f32 %v461, %v1007
        %v1014 = vmul.f32 %v462, %v1006
        %v1015 = vmul.f32 %v461, %v1005
        %v1016 = vmul.f32 %v462, %v1004
        %v1017 = vmul.f32 %v461, %v1003
        %v1018 = vmul.f32 %v462, %v1010
        %v1019 = vadd.f32 %v987, %v1011
        %v1020 = vadd.f32 %v988, %v1012
        %v1021 = vadd.f32 %v989, %v1013
        %v1022 = vadd.f32 %v990, %v1014
        %v1023 = vadd.f32 %v991, %v1015
        %v1024 = vadd.f32 %v992, %v1016
        %v1025 = vadd.f32 %v993, %v1017
        %v1026 = vadd.f32 %v994, %v1018
        %v1027 = vrot.slane %v987, 7
        %v1028 = vrot.slane %v988, 7
        %v1029 = vrot.slane %v989, 7
        %v1030 = vrot.slane %v990, 7
        %v1031 = vrot.slane %v991, 7
        %v1032 = vrot.slane %v992, 7
        %v1033 = vrot.slane %v993, 7
        %v1034 = vrot.slane %v994, 7
        %v1035 = vsel %vm520, %v1033, %v1034
        %v1036 = vsel %vm520, %v1032, %v1033
        %v1037 = vsel %vm520, %v1031, %v1032
        %v1038 = vsel %vm520, %v1030, %v1031
        %v1039 = vsel %vm520, %v1029, %v1030
        %v1040 = vsel %vm520, %v1028, %v1029
        %v1041 = vsel %vm520, %v1027, %v1028
        %v1042 = vsel %vm520, %v1034, %v1027
        %v1043 = vmul.f32 %v465, %v1042
        %v1044 = vmul.f32 %v466, %v1041
        %v1045 = vmul.f32 %v465, %v1040
        %v1046 = vmul.f32 %v466, %v1039
        %v1047 = vmul.f32 %v465, %v1038
        %v1048 = vmul.f32 %v466, %v1037
        %v1049 = vmul.f32 %v465, %v1036
        %v1050 = vmul.f32 %v466, %v1035
        %v1051 = vadd.f32 %v1019, %v1043
        %v1052 = vadd.f32 %v1020, %v1044
        %v1053 = vadd.f32 %v1021, %v1045
        %v1054 = vadd.f32 %v1022, %v1046
        %v1055 = vadd.f32 %v1023, %v1047
        %v1056 = vadd.f32 %v1024, %v1048
        %v1057 = vadd.f32 %v1025, %v1049
        %v1058 = vadd.f32 %v1026, %v1050
        %v1059 = vrot.slane %v987, 2
        %v1060 = vrot.slane %v988, 2
        %v1061 = vrot.slane %v989, 2
        %v1062 = vrot.slane %v990, 2
        %v1063 = vrot.slane %v991, 2
        %v1064 = vrot.slane %v992, 2
        %v1065 = vrot.slane %v993, 2
        %v1066 = vrot.slane %v994, 2
        %v1067 = vsel %vm553, %v1065, %v1066
        %v1068 = vsel %vm553, %v1064, %v1065
        %v1069 = vsel %vm553, %v1063, %v1064
        %v1070 = vsel %vm553, %v1062, %v1063
        %v1071 = vsel %vm553, %v1061, %v1062
        %v1072 = vsel %vm553, %v1060, %v1061
        %v1073 = vsel %vm553, %v1059, %v1060
        %v1074 = vsel %vm553, %v1066, %v1059
        %v1075 = vmul.f32 %v473, %v1073
        %v1076 = vmul.f32 %v474, %v1072
        %v1077 = vmul.f32 %v473, %v1071
        %v1078 = vmul.f32 %v474, %v1070
        %v1079 = vmul.f32 %v473, %v1069
        %v1080 = vmul.f32 %v474, %v1068
        %v1081 = vmul.f32 %v473, %v1067
        %v1082 = vmul.f32 %v474, %v1074
        %v1083 = vadd.f32 %v1051, %v1075
        %v1084 = vadd.f32 %v1052, %v1076
        %v1085 = vadd.f32 %v1053, %v1077
        %v1086 = vadd.f32 %v1054, %v1078
        %v1087 = vadd.f32 %v1055, %v1079
        %v1088 = vadd.f32 %v1056, %v1080
        %v1089 = vadd.f32 %v1057, %v1081
        %v1090 = vadd.f32 %v1058, %v1082
        %v1091 = vrot.slane %v987, 6
        %v1092 = vrot.slane %v988, 6
        %v1093 = vrot.slane %v989, 6
        %v1094 = vrot.slane %v990, 6
        %v1095 = vrot.slane %v991, 6
        %v1096 = vrot.slane %v992, 6
        %v1097 = vrot.slane %v993, 6
        %v1098 = vrot.slane %v994, 6
        %v1099 = vsel %vm586, %v1097, %v1098
        %v1100 = vsel %vm586, %v1096, %v1097
        %v1101 = vsel %vm586, %v1095, %v1096
        %v1102 = vsel %vm586, %v1094, %v1095
        %v1103 = vsel %vm586, %v1093, %v1094
        %v1104 = vsel %vm586, %v1092, %v1093
        %v1105 = vsel %vm586, %v1091, %v1092
        %v1106 = vsel %vm586, %v1098, %v1091
        %v1107 = vmul.f32 %v477, %v1106
        %v1108 = vmul.f32 %v478, %v1105
        %v1109 = vmul.f32 %v477, %v1104
        %v1110 = vmul.f32 %v478, %v1103
        %v1111 = vmul.f32 %v477, %v1102
        %v1112 = vmul.f32 %v478, %v1101
        %v1113 = vmul.f32 %v477, %v1100
        %v1114 = vmul.f32 %v478, %v1099
        %v1115 = vadd.f32 %v1083, %v1107
        %v1116 = vadd.f32 %v1084, %v1108
        %v1117 = vadd.f32 %v1085, %v1109
        %v1118 = vadd.f32 %v1086, %v1110
        %v1119 = vadd.f32 %v1087, %v1111
        %v1120 = vadd.f32 %v1088, %v1112
        %v1121 = vadd.f32 %v1089, %v1113
        %v1122 = vadd.f32 %v1090, %v1114
        %1123 = vrot.lane.b32.xlu0 %v284, 127
        %v1124 = vpop.permute.xlu0 %1123
        %1125 = vrot.lane.b32.xlu0 %v285, 127
        %v1126 = vpop.permute.xlu0 %1125
        %1127 = vrot.lane.b32.xlu0 %v286, 127
        %v1128 = vpop.permute.xlu0 %1127
        %1129 = vrot.lane.b32.xlu0 %v287, 127
        %v1130 = vpop.permute.xlu0 %1129
        %1131 = vrot.lane.b32.xlu0 %v288, 127
        %v1132 = vpop.permute.xlu0 %1131
        %1133 = vrot.lane.b32.xlu0 %v289, 127
        %v1134 = vpop.permute.xlu0 %1133
        %1135 = vrot.lane.b32.xlu0 %v290, 127
        %v1136 = vpop.permute.xlu0 %1135
        %1137 = vrot.lane.b32.xlu0 %v291, 127
        %v1138 = vpop.permute.xlu0 %1137
        %v1139 = vmul.f32 %v298, %v1124
        %v1140 = vmul.f32 %v298, %v1126
        %v1141 = vmul.f32 %v298, %v1128
        %v1142 = vmul.f32 %v298, %v1130
        %v1143 = vmul.f32 %v298, %v1132
        %v1144 = vmul.f32 %v298, %v1134
        %v1145 = vmul.f32 %v298, %v1136
        %v1146 = vmul.f32 %v298, %v1138
        %v1147 = vadd.f32 %v284, %v1139
        %v1148 = vadd.f32 %v285, %v1140
        %v1149 = vadd.f32 %v286, %v1141
        %v1150 = vadd.f32 %v287, %v1142
        %v1151 = vadd.f32 %v288, %v1143
        %v1152 = vadd.f32 %v289, %v1144
        %v1153 = vadd.f32 %v290, %v1145
        %v1154 = vadd.f32 %v291, %v1146
        %1155 = vrot.lane.b32.xlu0 %v284, 1
        %v1156 = vpop.permute.xlu0 %1155
        %1157 = vrot.lane.b32.xlu0 %v285, 1
        %v1158 = vpop.permute.xlu0 %1157
        %1159 = vrot.lane.b32.xlu0 %v286, 1
        %v1160 = vpop.permute.xlu0 %1159
        %1161 = vrot.lane.b32.xlu0 %v287, 1
        %v1162 = vpop.permute.xlu0 %1161
        %1163 = vrot.lane.b32.xlu0 %v288, 1
        %v1164 = vpop.permute.xlu0 %1163
        %1165 = vrot.lane.b32.xlu0 %v289, 1
        %v1166 = vpop.permute.xlu0 %1165
        %1167 = vrot.lane.b32.xlu0 %v290, 1
        %v1168 = vpop.permute.xlu0 %1167
        %1169 = vrot.lane.b32.xlu0 %v291, 1
        %v1170 = vpop.permute.xlu0 %1169
        %v1171 = vmul.f32 %v304, %v1156
        %v1172 = vmul.f32 %v304, %v1158
        %v1173 = vmul.f32 %v304, %v1160
        %v1174 = vmul.f32 %v304, %v1162
        %v1175 = vmul.f32 %v304, %v1164
        %v1176 = vmul.f32 %v304, %v1166
        %v1177 = vmul.f32 %v304, %v1168
        %v1178 = vmul.f32 %v304, %v1170
        %v1179 = vadd.f32 %v1147, %v1171
        %v1180 = vadd.f32 %v1148, %v1172
        %v1181 = vadd.f32 %v1149, %v1173
        %v1182 = vadd.f32 %v1150, %v1174
        %v1183 = vadd.f32 %v1151, %v1175
        %v1184 = vadd.f32 %v1152, %v1176
        %v1185 = vadd.f32 %v1153, %v1177
        %v1186 = vadd.f32 %v1154, %v1178
        %1187 = vrot.lane.b32.xlu0 %v284, 126
        %v1188 = vpop.permute.xlu0 %1187
        %1189 = vrot.lane.b32.xlu0 %v285, 126
        %v1190 = vpop.permute.xlu0 %1189
        %1191 = vrot.lane.b32.xlu0 %v286, 126
        %v1192 = vpop.permute.xlu0 %1191
        %1193 = vrot.lane.b32.xlu0 %v287, 126
        %v1194 = vpop.permute.xlu0 %1193
        %1195 = vrot.lane.b32.xlu0 %v288, 126
        %v1196 = vpop.permute.xlu0 %1195
        %1197 = vrot.lane.b32.xlu0 %v289, 126
        %v1198 = vpop.permute.xlu0 %1197
        %1199 = vrot.lane.b32.xlu0 %v290, 126
        %v1200 = vpop.permute.xlu0 %1199
        %1201 = vrot.lane.b32.xlu0 %v291, 126
        %v1202 = vpop.permute.xlu0 %1201
        %v1203 = vmul.f32 %v301, %v1188
        %v1204 = vmul.f32 %v301, %v1190
        %v1205 = vmul.f32 %v301, %v1192
        %v1206 = vmul.f32 %v301, %v1194
        %v1207 = vmul.f32 %v301, %v1196
        %v1208 = vmul.f32 %v301, %v1198
        %v1209 = vmul.f32 %v301, %v1200
        %v1210 = vmul.f32 %v301, %v1202
        %v1211 = vadd.f32 %v1179, %v1203
        %v1212 = vadd.f32 %v1180, %v1204
        %v1213 = vadd.f32 %v1181, %v1205
        %v1214 = vadd.f32 %v1182, %v1206
        %v1215 = vadd.f32 %v1183, %v1207
        %v1216 = vadd.f32 %v1184, %v1208
        %v1217 = vadd.f32 %v1185, %v1209
        %v1218 = vadd.f32 %v1186, %v1210
        %1219 = vrot.lane.b32.xlu0 %v284, 2
        %v1220 = vpop.permute.xlu0 %1219
        %1221 = vrot.lane.b32.xlu0 %v285, 2
        %v1222 = vpop.permute.xlu0 %1221
        %1223 = vrot.lane.b32.xlu0 %v286, 2
        %v1224 = vpop.permute.xlu0 %1223
        %1225 = vrot.lane.b32.xlu0 %v287, 2
        %v1226 = vpop.permute.xlu0 %1225
        %1227 = vrot.lane.b32.xlu0 %v288, 2
        %v1228 = vpop.permute.xlu0 %1227
        %1229 = vrot.lane.b32.xlu0 %v289, 2
        %v1230 = vpop.permute.xlu0 %1229
        %1231 = vrot.lane.b32.xlu0 %v290, 2
        %v1232 = vpop.permute.xlu0 %1231
        %1233 = vrot.lane.b32.xlu0 %v291, 2
        %v1234 = vpop.permute.xlu0 %1233
        %v1235 = vmul.f32 %v307, %v1220
        %v1236 = vmul.f32 %v307, %v1222
        %v1237 = vmul.f32 %v307, %v1224
        %v1238 = vmul.f32 %v307, %v1226
        %v1239 = vmul.f32 %v307, %v1228
        %v1240 = vmul.f32 %v307, %v1230
        %v1241 = vmul.f32 %v307, %v1232
        %v1242 = vmul.f32 %v307, %v1234
        %v1243 = vadd.f32 %v1211, %v1235
        %v1244 = vadd.f32 %v1212, %v1236
        %v1245 = vadd.f32 %v1213, %v1237
        %v1246 = vadd.f32 %v1214, %v1238
        %v1247 = vadd.f32 %v1215, %v1239
        %v1248 = vadd.f32 %v1216, %v1240
        %v1249 = vadd.f32 %v1217, %v1241
        %v1250 = vadd.f32 %v1218, %v1242
        %v1251 = vrot.slane %v1243, 1
        %v1252 = vrot.slane %v1244, 1
        %v1253 = vrot.slane %v1245, 1
        %v1254 = vrot.slane %v1246, 1
        %v1255 = vrot.slane %v1247, 1
        %v1256 = vrot.slane %v1248, 1
        %v1257 = vrot.slane %v1249, 1
        %v1258 = vrot.slane %v1250, 1
        %v1259 = vsel %vm487, %v1257, %v1258
        %v1260 = vsel %vm487, %v1256, %v1257
        %v1261 = vsel %vm487, %v1255, %v1256
        %v1262 = vsel %vm487, %v1254, %v1255
        %v1263 = vsel %vm487, %v1253, %v1254
        %v1264 = vsel %vm487, %v1252, %v1253
        %v1265 = vsel %vm487, %v1251, %v1252
        %v1266 = vsel %vm487, %v1258, %v1251
        %v1267 = vmul.f32 %v461, %v1265
        %v1268 = vmul.f32 %v462, %v1264
        %v1269 = vmul.f32 %v461, %v1263
        %v1270 = vmul.f32 %v462, %v1262
        %v1271 = vmul.f32 %v461, %v1261
        %v1272 = vmul.f32 %v462, %v1260
        %v1273 = vmul.f32 %v461, %v1259
        %v1274 = vmul.f32 %v462, %v1266
        %v1275 = vadd.f32 %v1243, %v1267
        %v1276 = vadd.f32 %v1244, %v1268
        %v1277 = vadd.f32 %v1245, %v1269
        %v1278 = vadd.f32 %v1246, %v1270
        %v1279 = vadd.f32 %v1247, %v1271
        %v1280 = vadd.f32 %v1248, %v1272
        %v1281 = vadd.f32 %v1249, %v1273
        %v1282 = vadd.f32 %v1250, %v1274
        %v1283 = vrot.slane %v1243, 7
        %v1284 = vrot.slane %v1244, 7
        %v1285 = vrot.slane %v1245, 7
        %v1286 = vrot.slane %v1246, 7
        %v1287 = vrot.slane %v1247, 7
        %v1288 = vrot.slane %v1248, 7
        %v1289 = vrot.slane %v1249, 7
        %v1290 = vrot.slane %v1250, 7
        %v1291 = vsel %vm520, %v1289, %v1290
        %v1292 = vsel %vm520, %v1288, %v1289
        %v1293 = vsel %vm520, %v1287, %v1288
        %v1294 = vsel %vm520, %v1286, %v1287
        %v1295 = vsel %vm520, %v1285, %v1286
        %v1296 = vsel %vm520, %v1284, %v1285
        %v1297 = vsel %vm520, %v1283, %v1284
        %v1298 = vsel %vm520, %v1290, %v1283
        %v1299 = vmul.f32 %v465, %v1298
        %v1300 = vmul.f32 %v466, %v1297
        %v1301 = vmul.f32 %v465, %v1296
        %v1302 = vmul.f32 %v466, %v1295
        %v1303 = vmul.f32 %v465, %v1294
        %v1304 = vmul.f32 %v466, %v1293
        %v1305 = vmul.f32 %v465, %v1292
        %v1306 = vmul.f32 %v466, %v1291
        %v1307 = vadd.f32 %v1275, %v1299
        %v1308 = vadd.f32 %v1276, %v1300
        %v1309 = vadd.f32 %v1277, %v1301
        %v1310 = vadd.f32 %v1278, %v1302
        %v1311 = vadd.f32 %v1279, %v1303
        %v1312 = vadd.f32 %v1280, %v1304
        %v1313 = vadd.f32 %v1281, %v1305
        %v1314 = vadd.f32 %v1282, %v1306
        %v1315 = vrot.slane %v1243, 2
        %v1316 = vrot.slane %v1244, 2
        %v1317 = vrot.slane %v1245, 2
        %v1318 = vrot.slane %v1246, 2
        %v1319 = vrot.slane %v1247, 2
        %v1320 = vrot.slane %v1248, 2
        %v1321 = vrot.slane %v1249, 2
        %v1322 = vrot.slane %v1250, 2
        %v1323 = vsel %vm553, %v1321, %v1322
        %v1324 = vsel %vm553, %v1320, %v1321
        %v1325 = vsel %vm553, %v1319, %v1320
        %v1326 = vsel %vm553, %v1318, %v1319
        %v1327 = vsel %vm553, %v1317, %v1318
        %v1328 = vsel %vm553, %v1316, %v1317
        %v1329 = vsel %vm553, %v1315, %v1316
        %v1330 = vsel %vm553, %v1322, %v1315
        %v1331 = vmul.f32 %v473, %v1329
        %v1332 = vmul.f32 %v474, %v1328
        %v1333 = vmul.f32 %v473, %v1327
        %v1334 = vmul.f32 %v474, %v1326
        %v1335 = vmul.f32 %v473, %v1325
        %v1336 = vmul.f32 %v474, %v1324
        %v1337 = vmul.f32 %v473, %v1323
        %v1338 = vmul.f32 %v474, %v1330
        %v1339 = vadd.f32 %v1307, %v1331
        %v1340 = vadd.f32 %v1308, %v1332
        %v1341 = vadd.f32 %v1309, %v1333
        %v1342 = vadd.f32 %v1310, %v1334
        %v1343 = vadd.f32 %v1311, %v1335
        %v1344 = vadd.f32 %v1312, %v1336
        %v1345 = vadd.f32 %v1313, %v1337
        %v1346 = vadd.f32 %v1314, %v1338
        %v1347 = vrot.slane %v1243, 6
        %v1348 = vrot.slane %v1244, 6
        %v1349 = vrot.slane %v1245, 6
        %v1350 = vrot.slane %v1246, 6
        %v1351 = vrot.slane %v1247, 6
        %v1352 = vrot.slane %v1248, 6
        %v1353 = vrot.slane %v1249, 6
        %v1354 = vrot.slane %v1250, 6
        %v1355 = vsel %vm586, %v1353, %v1354
        %v1356 = vsel %vm586, %v1352, %v1353
        %v1357 = vsel %vm586, %v1351, %v1352
        %v1358 = vsel %vm586, %v1350, %v1351
        %v1359 = vsel %vm586, %v1349, %v1350
        %v1360 = vsel %vm586, %v1348, %v1349
        %v1361 = vsel %vm586, %v1347, %v1348
        %v1362 = vsel %vm586, %v1354, %v1347
        %v1363 = vmul.f32 %v477, %v1362
        %v1364 = vmul.f32 %v478, %v1361
        %v1365 = vmul.f32 %v477, %v1360
        %v1366 = vmul.f32 %v478, %v1359
        %v1367 = vmul.f32 %v477, %v1358
        %v1368 = vmul.f32 %v478, %v1357
        %v1369 = vmul.f32 %v477, %v1356
        %v1370 = vmul.f32 %v478, %v1355
        %v1371 = vadd.f32 %v1339, %v1363
        %v1372 = vadd.f32 %v1340, %v1364
        %v1373 = vadd.f32 %v1341, %v1365
        %v1374 = vadd.f32 %v1342, %v1366
        %v1375 = vadd.f32 %v1343, %v1367
        %v1376 = vadd.f32 %v1344, %v1368
        %v1377 = vadd.f32 %v1345, %v1369
        %v1378 = vadd.f32 %v1346, %v1370
        %v1379 = vmul.f32 %v603, %v292
        %v1380 = vmul.f32 %v604, %v293
        %v1381 = vmul.f32 %v605, %v292
        %v1382 = vmul.f32 %v606, %v293
        %v1383 = vmul.f32 %v607, %v292
        %v1384 = vmul.f32 %v608, %v293
        %v1385 = vmul.f32 %v609, %v292
        %v1386 = vmul.f32 %v610, %v293
        %v1387 = vmul.f32 %v1371, %v292
        %v1388 = vmul.f32 %v1372, %v293
        %v1389 = vmul.f32 %v1373, %v292
        %v1390 = vmul.f32 %v1374, %v293
        %v1391 = vmul.f32 %v1375, %v292
        %v1392 = vmul.f32 %v1376, %v293
        %v1393 = vmul.f32 %v1377, %v292
        %v1394 = vmul.f32 %v1378, %v293
        %v1395 = vmul.f32 %v1115, %v292
        %v1396 = vmul.f32 %v1116, %v293
        %v1397 = vmul.f32 %v1117, %v292
        %v1398 = vmul.f32 %v1118, %v293
        %v1399 = vmul.f32 %v1119, %v292
        %v1400 = vmul.f32 %v1120, %v293
        %v1401 = vmul.f32 %v1121, %v292
        %v1402 = vmul.f32 %v1122, %v293
        %v1403 = vmul.f32 %v1379, %v1387
        %v1404 = vmul.f32 %v1380, %v1388
        %v1405 = vmul.f32 %v1381, %v1389
        %v1406 = vmul.f32 %v1382, %v1390
        %v1407 = vmul.f32 %v1383, %v1391
        %v1408 = vmul.f32 %v1384, %v1392
        %v1409 = vmul.f32 %v1385, %v1393
        %v1410 = vmul.f32 %v1386, %v1394
        %v1411 = vsub.f32 %v1395, %v1403
        %v1412 = vsub.f32 %v1396, %v1404
        %v1413 = vsub.f32 %v1397, %v1405
        %v1414 = vsub.f32 %v1398, %v1406
        %v1415 = vsub.f32 %v1399, %v1407
        %v1416 = vsub.f32 %v1400, %v1408
        %v1417 = vsub.f32 %v1401, %v1409
        %v1418 = vsub.f32 %v1402, %v1410
        %v1419 = vmul.f32 %v859, %v292
        %v1420 = vmul.f32 %v860, %v293
        %v1421 = vmul.f32 %v861, %v292
        %v1422 = vmul.f32 %v862, %v293
        %v1423 = vmul.f32 %v863, %v292
        %v1424 = vmul.f32 %v864, %v293
        %v1425 = vmul.f32 %v865, %v292
        %v1426 = vmul.f32 %v866, %v293
        %v1427 = vmul.f32 %v1379, %v1379
        %v1428 = vmul.f32 %v1380, %v1380
        %v1429 = vmul.f32 %v1381, %v1381
        %v1430 = vmul.f32 %v1382, %v1382
        %v1431 = vmul.f32 %v1383, %v1383
        %v1432 = vmul.f32 %v1384, %v1384
        %v1433 = vmul.f32 %v1385, %v1385
        %v1434 = vmul.f32 %v1386, %v1386
        %v1435 = vsub.f32 %v1419, %v1427
        %v1436 = vsub.f32 %v1420, %v1428
        %v1437 = vsub.f32 %v1421, %v1429
        %v1438 = vsub.f32 %v1422, %v1430
        %v1439 = vsub.f32 %v1423, %v1431
        %v1440 = vsub.f32 %v1424, %v1432
        %v1441 = vsub.f32 %v1425, %v1433
        %v1442 = vsub.f32 %v1426, %v1434
        %v1443 = vadd.f32 %v1435, 1e-08
        %v1444 = vadd.f32 %v1436, 1e-08
        %v1445 = vadd.f32 %v1437, 1e-08
        %v1446 = vadd.f32 %v1438, 1e-08
        %v1447 = vadd.f32 %v1439, 1e-08
        %v1448 = vadd.f32 %v1440, 1e-08
        %v1449 = vadd.f32 %v1441, 1e-08
        %v1450 = vadd.f32 %v1442, 1e-08
        %v1451 = vrcp.pop %v1443
        %v1452 = vrcp.pop %v1444
        %v1453 = vrcp.pop %v1445
        %v1454 = vrcp.pop %v1446
        %v1455 = vrcp.pop %v1447
        %v1456 = vrcp.pop %v1448
        %v1457 = vrcp.pop %v1449
        %v1458 = vrcp.pop %v1450
        %v1459 = vmul.f32 %v1443, %v1451
        %v1460 = vmul.f32 %v1444, %v1452
        %v1461 = vmul.f32 %v1445, %v1453
        %v1462 = vmul.f32 %v1446, %v1454
        %v1463 = vmul.f32 %v1447, %v1455
        %v1464 = vmul.f32 %v1448, %v1456
        %v1465 = vmul.f32 %v1449, %v1457
        %v1466 = vmul.f32 %v1450, %v1458
        %v1467 = vsub.f32 2.0, %v1459
        %v1468 = vsub.f32 2.0, %v1460
        %v1469 = vsub.f32 2.0, %v1461
        %v1470 = vsub.f32 2.0, %v1462
        %v1471 = vsub.f32 2.0, %v1463
        %v1472 = vsub.f32 2.0, %v1464
        %v1473 = vsub.f32 2.0, %v1465
        %v1474 = vsub.f32 2.0, %v1466
        %v1475 = vmul.f32 %v1451, %v1467
        %v1476 = vmul.f32 %v1452, %v1468
        %v1477 = vmul.f32 %v1453, %v1469
        %v1478 = vmul.f32 %v1454, %v1470
        %v1479 = vmul.f32 %v1455, %v1471
        %v1480 = vmul.f32 %v1456, %v1472
        %v1481 = vmul.f32 %v1457, %v1473
        %v1482 = vmul.f32 %v1458, %v1474
        %v1483 = vmul.f32 %v1411, %v1475
        %v1484 = vmul.f32 %v1412, %v1476
        %v1485 = vmul.f32 %v1413, %v1477
        %v1486 = vmul.f32 %v1414, %v1478
        %v1487 = vmul.f32 %v1415, %v1479
        %v1488 = vmul.f32 %v1416, %v1480
        %v1489 = vmul.f32 %v1417, %v1481
        %v1490 = vmul.f32 %v1418, %v1482
        %v1491 = vmul.f32 %v1483, %v1379
        %v1492 = vmul.f32 %v1484, %v1380
        %v1493 = vmul.f32 %v1485, %v1381
        %v1494 = vmul.f32 %v1486, %v1382
        %v1495 = vmul.f32 %v1487, %v1383
        %v1496 = vmul.f32 %v1488, %v1384
        %v1497 = vmul.f32 %v1489, %v1385
        %v1498 = vmul.f32 %v1490, %v1386
        %v1499 = vsub.f32 %v1387, %v1491
        %v1500 = vsub.f32 %v1388, %v1492
        %v1501 = vsub.f32 %v1389, %v1493
        %v1502 = vsub.f32 %v1390, %v1494
        %v1503 = vsub.f32 %v1391, %v1495
        %v1504 = vsub.f32 %v1392, %v1496
        %v1505 = vsub.f32 %v1393, %v1497
        %v1506 = vsub.f32 %v1394, %v1498
        %1507 = vrot.lane.b32.xlu0 %v1483, 127
        %v1508 = vpop.permute.xlu0 %1507
        %1509 = vrot.lane.b32.xlu0 %v1484, 127
        %v1510 = vpop.permute.xlu0 %1509
        %1511 = vrot.lane.b32.xlu0 %v1485, 127
        %v1512 = vpop.permute.xlu0 %1511
        %1513 = vrot.lane.b32.xlu0 %v1486, 127
        %v1514 = vpop.permute.xlu0 %1513
        %1515 = vrot.lane.b32.xlu0 %v1487, 127
        %v1516 = vpop.permute.xlu0 %1515
        %1517 = vrot.lane.b32.xlu0 %v1488, 127
        %v1518 = vpop.permute.xlu0 %1517
        %1519 = vrot.lane.b32.xlu0 %v1489, 127
        %v1520 = vpop.permute.xlu0 %1519
        %1521 = vrot.lane.b32.xlu0 %v1490, 127
        %v1522 = vpop.permute.xlu0 %1521
        %v1523 = vmul.f32 %v298, %v1508
        %v1524 = vmul.f32 %v298, %v1510
        %v1525 = vmul.f32 %v298, %v1512
        %v1526 = vmul.f32 %v298, %v1514
        %v1527 = vmul.f32 %v298, %v1516
        %v1528 = vmul.f32 %v298, %v1518
        %v1529 = vmul.f32 %v298, %v1520
        %v1530 = vmul.f32 %v298, %v1522
        %v1531 = vadd.f32 %v1483, %v1523
        %v1532 = vadd.f32 %v1484, %v1524
        %v1533 = vadd.f32 %v1485, %v1525
        %v1534 = vadd.f32 %v1486, %v1526
        %v1535 = vadd.f32 %v1487, %v1527
        %v1536 = vadd.f32 %v1488, %v1528
        %v1537 = vadd.f32 %v1489, %v1529
        %v1538 = vadd.f32 %v1490, %v1530
        %1539 = vrot.lane.b32.xlu0 %v1483, 1
        %v1540 = vpop.permute.xlu0 %1539
        %1541 = vrot.lane.b32.xlu0 %v1484, 1
        %v1542 = vpop.permute.xlu0 %1541
        %1543 = vrot.lane.b32.xlu0 %v1485, 1
        %v1544 = vpop.permute.xlu0 %1543
        %1545 = vrot.lane.b32.xlu0 %v1486, 1
        %v1546 = vpop.permute.xlu0 %1545
        %1547 = vrot.lane.b32.xlu0 %v1487, 1
        %v1548 = vpop.permute.xlu0 %1547
        %1549 = vrot.lane.b32.xlu0 %v1488, 1
        %v1550 = vpop.permute.xlu0 %1549
        %1551 = vrot.lane.b32.xlu0 %v1489, 1
        %v1552 = vpop.permute.xlu0 %1551
        %1553 = vrot.lane.b32.xlu0 %v1490, 1
        %v1554 = vpop.permute.xlu0 %1553
        %v1555 = vmul.f32 %v304, %v1540
        %v1556 = vmul.f32 %v304, %v1542
        %v1557 = vmul.f32 %v304, %v1544
        %v1558 = vmul.f32 %v304, %v1546
        %v1559 = vmul.f32 %v304, %v1548
        %v1560 = vmul.f32 %v304, %v1550
        %v1561 = vmul.f32 %v304, %v1552
        %v1562 = vmul.f32 %v304, %v1554
        %v1563 = vadd.f32 %v1531, %v1555
        %v1564 = vadd.f32 %v1532, %v1556
        %v1565 = vadd.f32 %v1533, %v1557
        %v1566 = vadd.f32 %v1534, %v1558
        %v1567 = vadd.f32 %v1535, %v1559
        %v1568 = vadd.f32 %v1536, %v1560
        %v1569 = vadd.f32 %v1537, %v1561
        %v1570 = vadd.f32 %v1538, %v1562
        %1571 = vrot.lane.b32.xlu0 %v1483, 126
        %v1572 = vpop.permute.xlu0 %1571
        %1573 = vrot.lane.b32.xlu0 %v1484, 126
        %v1574 = vpop.permute.xlu0 %1573
        %1575 = vrot.lane.b32.xlu0 %v1485, 126
        %v1576 = vpop.permute.xlu0 %1575
        %1577 = vrot.lane.b32.xlu0 %v1486, 126
        %v1578 = vpop.permute.xlu0 %1577
        %1579 = vrot.lane.b32.xlu0 %v1487, 126
        %v1580 = vpop.permute.xlu0 %1579
        %1581 = vrot.lane.b32.xlu0 %v1488, 126
        %v1582 = vpop.permute.xlu0 %1581
        %1583 = vrot.lane.b32.xlu0 %v1489, 126
        %v1584 = vpop.permute.xlu0 %1583
        %1585 = vrot.lane.b32.xlu0 %v1490, 126
        %v1586 = vpop.permute.xlu0 %1585
        %v1587 = vmul.f32 %v301, %v1572
        %v1588 = vmul.f32 %v301, %v1574
        %v1589 = vmul.f32 %v301, %v1576
        %v1590 = vmul.f32 %v301, %v1578
        %v1591 = vmul.f32 %v301, %v1580
        %v1592 = vmul.f32 %v301, %v1582
        %v1593 = vmul.f32 %v301, %v1584
        %v1594 = vmul.f32 %v301, %v1586
        %v1595 = vadd.f32 %v1563, %v1587
        %v1596 = vadd.f32 %v1564, %v1588
        %v1597 = vadd.f32 %v1565, %v1589
        %v1598 = vadd.f32 %v1566, %v1590
        %v1599 = vadd.f32 %v1567, %v1591
        %v1600 = vadd.f32 %v1568, %v1592
        %v1601 = vadd.f32 %v1569, %v1593
        %v1602 = vadd.f32 %v1570, %v1594
        %1603 = vrot.lane.b32.xlu0 %v1483, 2
        %v1604 = vpop.permute.xlu0 %1603
        %1605 = vrot.lane.b32.xlu0 %v1484, 2
        %v1606 = vpop.permute.xlu0 %1605
        %1607 = vrot.lane.b32.xlu0 %v1485, 2
        %v1608 = vpop.permute.xlu0 %1607
        %1609 = vrot.lane.b32.xlu0 %v1486, 2
        %v1610 = vpop.permute.xlu0 %1609
        %1611 = vrot.lane.b32.xlu0 %v1487, 2
        %v1612 = vpop.permute.xlu0 %1611
        %1613 = vrot.lane.b32.xlu0 %v1488, 2
        %v1614 = vpop.permute.xlu0 %1613
        %1615 = vrot.lane.b32.xlu0 %v1489, 2
        %v1616 = vpop.permute.xlu0 %1615
        %1617 = vrot.lane.b32.xlu0 %v1490, 2
        %v1618 = vpop.permute.xlu0 %1617
        %v1619 = vmul.f32 %v307, %v1604
        %v1620 = vmul.f32 %v307, %v1606
        %v1621 = vmul.f32 %v307, %v1608
        %v1622 = vmul.f32 %v307, %v1610
        %v1623 = vmul.f32 %v307, %v1612
        %v1624 = vmul.f32 %v307, %v1614
        %v1625 = vmul.f32 %v307, %v1616
        %v1626 = vmul.f32 %v307, %v1618
        %v1627 = vadd.f32 %v1595, %v1619
        %v1628 = vadd.f32 %v1596, %v1620
        %v1629 = vadd.f32 %v1597, %v1621
        %v1630 = vadd.f32 %v1598, %v1622
        %v1631 = vadd.f32 %v1599, %v1623
        %v1632 = vadd.f32 %v1600, %v1624
        %v1633 = vadd.f32 %v1601, %v1625
        %v1634 = vadd.f32 %v1602, %v1626
        %v1635 = vrot.slane %v1627, 1
        %v1636 = vrot.slane %v1628, 1
        %v1637 = vrot.slane %v1629, 1
        %v1638 = vrot.slane %v1630, 1
        %v1639 = vrot.slane %v1631, 1
        %v1640 = vrot.slane %v1632, 1
        %v1641 = vrot.slane %v1633, 1
        %v1642 = vrot.slane %v1634, 1
        %v1643 = vsel %vm487, %v1641, %v1642
        %v1644 = vsel %vm487, %v1640, %v1641
        %v1645 = vsel %vm487, %v1639, %v1640
        %v1646 = vsel %vm487, %v1638, %v1639
        %v1647 = vsel %vm487, %v1637, %v1638
        %v1648 = vsel %vm487, %v1636, %v1637
        %v1649 = vsel %vm487, %v1635, %v1636
        %v1650 = vsel %vm487, %v1642, %v1635
        %v1651 = vmul.f32 %v461, %v1649
        %v1652 = vmul.f32 %v462, %v1648
        %v1653 = vmul.f32 %v461, %v1647
        %v1654 = vmul.f32 %v462, %v1646
        %v1655 = vmul.f32 %v461, %v1645
        %v1656 = vmul.f32 %v462, %v1644
        %v1657 = vmul.f32 %v461, %v1643
        %v1658 = vmul.f32 %v462, %v1650
        %v1659 = vadd.f32 %v1627, %v1651
        %v1660 = vadd.f32 %v1628, %v1652
        %v1661 = vadd.f32 %v1629, %v1653
        %v1662 = vadd.f32 %v1630, %v1654
        %v1663 = vadd.f32 %v1631, %v1655
        %v1664 = vadd.f32 %v1632, %v1656
        %v1665 = vadd.f32 %v1633, %v1657
        %v1666 = vadd.f32 %v1634, %v1658
        %v1667 = vrot.slane %v1627, 7
        %v1668 = vrot.slane %v1628, 7
        %v1669 = vrot.slane %v1629, 7
        %v1670 = vrot.slane %v1630, 7
        %v1671 = vrot.slane %v1631, 7
        %v1672 = vrot.slane %v1632, 7
        %v1673 = vrot.slane %v1633, 7
        %v1674 = vrot.slane %v1634, 7
        %v1675 = vsel %vm520, %v1673, %v1674
        %v1676 = vsel %vm520, %v1672, %v1673
        %v1677 = vsel %vm520, %v1671, %v1672
        %v1678 = vsel %vm520, %v1670, %v1671
        %v1679 = vsel %vm520, %v1669, %v1670
        %v1680 = vsel %vm520, %v1668, %v1669
        %v1681 = vsel %vm520, %v1667, %v1668
        %v1682 = vsel %vm520, %v1674, %v1667
        %v1683 = vmul.f32 %v465, %v1682
        %v1684 = vmul.f32 %v466, %v1681
        %v1685 = vmul.f32 %v465, %v1680
        %v1686 = vmul.f32 %v466, %v1679
        %v1687 = vmul.f32 %v465, %v1678
        %v1688 = vmul.f32 %v466, %v1677
        %v1689 = vmul.f32 %v465, %v1676
        %v1690 = vmul.f32 %v466, %v1675
        %v1691 = vadd.f32 %v1659, %v1683
        %v1692 = vadd.f32 %v1660, %v1684
        %v1693 = vadd.f32 %v1661, %v1685
        %v1694 = vadd.f32 %v1662, %v1686
        %v1695 = vadd.f32 %v1663, %v1687
        %v1696 = vadd.f32 %v1664, %v1688
        %v1697 = vadd.f32 %v1665, %v1689
        %v1698 = vadd.f32 %v1666, %v1690
        %v1699 = vrot.slane %v1627, 2
        %v1700 = vrot.slane %v1628, 2
        %v1701 = vrot.slane %v1629, 2
        %v1702 = vrot.slane %v1630, 2
        %v1703 = vrot.slane %v1631, 2
        %v1704 = vrot.slane %v1632, 2
        %v1705 = vrot.slane %v1633, 2
        %v1706 = vrot.slane %v1634, 2
        %v1707 = vsel %vm553, %v1705, %v1706
        %v1708 = vsel %vm553, %v1704, %v1705
        %v1709 = vsel %vm553, %v1703, %v1704
        %v1710 = vsel %vm553, %v1702, %v1703
        %v1711 = vsel %vm553, %v1701, %v1702
        %v1712 = vsel %vm553, %v1700, %v1701
        %v1713 = vsel %vm553, %v1699, %v1700
        %v1714 = vsel %vm553, %v1706, %v1699
        %v1715 = vmul.f32 %v473, %v1713
        %v1716 = vmul.f32 %v474, %v1712
        %v1717 = vmul.f32 %v473, %v1711
        %v1718 = vmul.f32 %v474, %v1710
        %v1719 = vmul.f32 %v473, %v1709
        %v1720 = vmul.f32 %v474, %v1708
        %v1721 = vmul.f32 %v473, %v1707
        %v1722 = vmul.f32 %v474, %v1714
        %v1723 = vadd.f32 %v1691, %v1715
        %v1724 = vadd.f32 %v1692, %v1716
        %v1725 = vadd.f32 %v1693, %v1717
        %v1726 = vadd.f32 %v1694, %v1718
        %v1727 = vadd.f32 %v1695, %v1719
        %v1728 = vadd.f32 %v1696, %v1720
        %v1729 = vadd.f32 %v1697, %v1721
        %v1730 = vadd.f32 %v1698, %v1722
        %v1731 = vrot.slane %v1627, 6
        %v1732 = vrot.slane %v1628, 6
        %v1733 = vrot.slane %v1629, 6
        %v1734 = vrot.slane %v1630, 6
        %v1735 = vrot.slane %v1631, 6
        %v1736 = vrot.slane %v1632, 6
        %v1737 = vrot.slane %v1633, 6
        %v1738 = vrot.slane %v1634, 6
        %v1739 = vsel %vm586, %v1737, %v1738
        %v1740 = vsel %vm586, %v1736, %v1737
        %v1741 = vsel %vm586, %v1735, %v1736
        %v1742 = vsel %vm586, %v1734, %v1735
        %v1743 = vsel %vm586, %v1733, %v1734
        %v1744 = vsel %vm586, %v1732, %v1733
        %v1745 = vsel %vm586, %v1731, %v1732
        %v1746 = vsel %vm586, %v1738, %v1731
        %v1747 = vmul.f32 %v477, %v1746
        %v1748 = vmul.f32 %v478, %v1745
        %v1749 = vmul.f32 %v477, %v1744
        %v1750 = vmul.f32 %v478, %v1743
        %v1751 = vmul.f32 %v477, %v1742
        %v1752 = vmul.f32 %v478, %v1741
        %v1753 = vmul.f32 %v477, %v1740
        %v1754 = vmul.f32 %v478, %v1739
        %v1755 = vadd.f32 %v1723, %v1747
        %v1756 = vadd.f32 %v1724, %v1748
        %v1757 = vadd.f32 %v1725, %v1749
        %v1758 = vadd.f32 %v1726, %v1750
        %v1759 = vadd.f32 %v1727, %v1751
        %v1760 = vadd.f32 %v1728, %v1752
        %v1761 = vadd.f32 %v1729, %v1753
        %v1762 = vadd.f32 %v1730, %v1754
        %1763 = vrot.lane.b32.xlu0 %v1499, 127
        %v1764 = vpop.permute.xlu0 %1763
        %1765 = vrot.lane.b32.xlu0 %v1500, 127
        %v1766 = vpop.permute.xlu0 %1765
        %1767 = vrot.lane.b32.xlu0 %v1501, 127
        %v1768 = vpop.permute.xlu0 %1767
        %1769 = vrot.lane.b32.xlu0 %v1502, 127
        %v1770 = vpop.permute.xlu0 %1769
        %1771 = vrot.lane.b32.xlu0 %v1503, 127
        %v1772 = vpop.permute.xlu0 %1771
        %1773 = vrot.lane.b32.xlu0 %v1504, 127
        %v1774 = vpop.permute.xlu0 %1773
        %1775 = vrot.lane.b32.xlu0 %v1505, 127
        %v1776 = vpop.permute.xlu0 %1775
        %1777 = vrot.lane.b32.xlu0 %v1506, 127
        %v1778 = vpop.permute.xlu0 %1777
        %v1779 = vmul.f32 %v298, %v1764
        %v1780 = vmul.f32 %v298, %v1766
        %v1781 = vmul.f32 %v298, %v1768
        %v1782 = vmul.f32 %v298, %v1770
        %v1783 = vmul.f32 %v298, %v1772
        %v1784 = vmul.f32 %v298, %v1774
        %v1785 = vmul.f32 %v298, %v1776
        %v1786 = vmul.f32 %v298, %v1778
        %v1787 = vadd.f32 %v1499, %v1779
        %v1788 = vadd.f32 %v1500, %v1780
        %v1789 = vadd.f32 %v1501, %v1781
        %v1790 = vadd.f32 %v1502, %v1782
        %v1791 = vadd.f32 %v1503, %v1783
        %v1792 = vadd.f32 %v1504, %v1784
        %v1793 = vadd.f32 %v1505, %v1785
        %v1794 = vadd.f32 %v1506, %v1786
        %1795 = vrot.lane.b32.xlu0 %v1499, 1
        %v1796 = vpop.permute.xlu0 %1795
        %1797 = vrot.lane.b32.xlu0 %v1500, 1
        %v1798 = vpop.permute.xlu0 %1797
        %1799 = vrot.lane.b32.xlu0 %v1501, 1
        %v1800 = vpop.permute.xlu0 %1799
        %1801 = vrot.lane.b32.xlu0 %v1502, 1
        %v1802 = vpop.permute.xlu0 %1801
        %1803 = vrot.lane.b32.xlu0 %v1503, 1
        %v1804 = vpop.permute.xlu0 %1803
        %1805 = vrot.lane.b32.xlu0 %v1504, 1
        %v1806 = vpop.permute.xlu0 %1805
        %1807 = vrot.lane.b32.xlu0 %v1505, 1
        %v1808 = vpop.permute.xlu0 %1807
        %1809 = vrot.lane.b32.xlu0 %v1506, 1
        %v1810 = vpop.permute.xlu0 %1809
        %v1811 = vmul.f32 %v304, %v1796
        %v1812 = vmul.f32 %v304, %v1798
        %v1813 = vmul.f32 %v304, %v1800
        %v1814 = vmul.f32 %v304, %v1802
        %v1815 = vmul.f32 %v304, %v1804
        %v1816 = vmul.f32 %v304, %v1806
        %v1817 = vmul.f32 %v304, %v1808
        %v1818 = vmul.f32 %v304, %v1810
        %v1819 = vadd.f32 %v1787, %v1811
        %v1820 = vadd.f32 %v1788, %v1812
        %v1821 = vadd.f32 %v1789, %v1813
        %v1822 = vadd.f32 %v1790, %v1814
        %v1823 = vadd.f32 %v1791, %v1815
        %v1824 = vadd.f32 %v1792, %v1816
        %v1825 = vadd.f32 %v1793, %v1817
        %v1826 = vadd.f32 %v1794, %v1818
        %1827 = vrot.lane.b32.xlu0 %v1499, 126
        %v1828 = vpop.permute.xlu0 %1827
        %1829 = vrot.lane.b32.xlu0 %v1500, 126
        %v1830 = vpop.permute.xlu0 %1829
        %1831 = vrot.lane.b32.xlu0 %v1501, 126
        %v1832 = vpop.permute.xlu0 %1831
        %1833 = vrot.lane.b32.xlu0 %v1502, 126
        %v1834 = vpop.permute.xlu0 %1833
        %1835 = vrot.lane.b32.xlu0 %v1503, 126
        %v1836 = vpop.permute.xlu0 %1835
        %1837 = vrot.lane.b32.xlu0 %v1504, 126
        %v1838 = vpop.permute.xlu0 %1837
        %1839 = vrot.lane.b32.xlu0 %v1505, 126
        %v1840 = vpop.permute.xlu0 %1839
        %1841 = vrot.lane.b32.xlu0 %v1506, 126
        %v1842 = vpop.permute.xlu0 %1841
        %v1843 = vmul.f32 %v301, %v1828
        %v1844 = vmul.f32 %v301, %v1830
        %v1845 = vmul.f32 %v301, %v1832
        %v1846 = vmul.f32 %v301, %v1834
        %v1847 = vmul.f32 %v301, %v1836
        %v1848 = vmul.f32 %v301, %v1838
        %v1849 = vmul.f32 %v301, %v1840
        %v1850 = vmul.f32 %v301, %v1842
        %v1851 = vadd.f32 %v1819, %v1843
        %v1852 = vadd.f32 %v1820, %v1844
        %v1853 = vadd.f32 %v1821, %v1845
        %v1854 = vadd.f32 %v1822, %v1846
        %v1855 = vadd.f32 %v1823, %v1847
        %v1856 = vadd.f32 %v1824, %v1848
        %v1857 = vadd.f32 %v1825, %v1849
        %v1858 = vadd.f32 %v1826, %v1850
        %1859 = vrot.lane.b32.xlu0 %v1499, 2
        %v1860 = vpop.permute.xlu0 %1859
        %1861 = vrot.lane.b32.xlu0 %v1500, 2
        %v1862 = vpop.permute.xlu0 %1861
        %1863 = vrot.lane.b32.xlu0 %v1501, 2
        %v1864 = vpop.permute.xlu0 %1863
        %1865 = vrot.lane.b32.xlu0 %v1502, 2
        %v1866 = vpop.permute.xlu0 %1865
        %1867 = vrot.lane.b32.xlu0 %v1503, 2
        %v1868 = vpop.permute.xlu0 %1867
        %1869 = vrot.lane.b32.xlu0 %v1504, 2
        %v1870 = vpop.permute.xlu0 %1869
        %1871 = vrot.lane.b32.xlu0 %v1505, 2
        %v1872 = vpop.permute.xlu0 %1871
        %1873 = vrot.lane.b32.xlu0 %v1506, 2
        %v1874 = vpop.permute.xlu0 %1873
        %v1875 = vmul.f32 %v307, %v1860
        %v1876 = vmul.f32 %v307, %v1862
        %v1877 = vmul.f32 %v307, %v1864
        %v1878 = vmul.f32 %v307, %v1866
        %v1879 = vmul.f32 %v307, %v1868
        %v1880 = vmul.f32 %v307, %v1870
        %v1881 = vmul.f32 %v307, %v1872
        %v1882 = vmul.f32 %v307, %v1874
        %v1883 = vadd.f32 %v1851, %v1875
        %v1884 = vadd.f32 %v1852, %v1876
        %v1885 = vadd.f32 %v1853, %v1877
        %v1886 = vadd.f32 %v1854, %v1878
        %v1887 = vadd.f32 %v1855, %v1879
        %v1888 = vadd.f32 %v1856, %v1880
        %v1889 = vadd.f32 %v1857, %v1881
        %v1890 = vadd.f32 %v1858, %v1882
        %v1891 = vrot.slane %v1883, 1
        %v1892 = vrot.slane %v1884, 1
        %v1893 = vrot.slane %v1885, 1
        %v1894 = vrot.slane %v1886, 1
        %v1895 = vrot.slane %v1887, 1
        %v1896 = vrot.slane %v1888, 1
        %v1897 = vrot.slane %v1889, 1
        %v1898 = vrot.slane %v1890, 1
        %v1899 = vsel %vm487, %v1897, %v1898
        %v1900 = vsel %vm487, %v1896, %v1897
        %v1901 = vsel %vm487, %v1895, %v1896
        %v1902 = vsel %vm487, %v1894, %v1895
        %v1903 = vsel %vm487, %v1893, %v1894
        %v1904 = vsel %vm487, %v1892, %v1893
        %v1905 = vsel %vm487, %v1891, %v1892
        %v1906 = vsel %vm487, %v1898, %v1891
        %v1907 = vmul.f32 %v461, %v1905
        %v1908 = vmul.f32 %v462, %v1904
        %v1909 = vmul.f32 %v461, %v1903
        %v1910 = vmul.f32 %v462, %v1902
        %v1911 = vmul.f32 %v461, %v1901
        %v1912 = vmul.f32 %v462, %v1900
        %v1913 = vmul.f32 %v461, %v1899
        %v1914 = vmul.f32 %v462, %v1906
        %v1915 = vadd.f32 %v1883, %v1907
        %v1916 = vadd.f32 %v1884, %v1908
        %v1917 = vadd.f32 %v1885, %v1909
        %v1918 = vadd.f32 %v1886, %v1910
        %v1919 = vadd.f32 %v1887, %v1911
        %v1920 = vadd.f32 %v1888, %v1912
        %v1921 = vadd.f32 %v1889, %v1913
        %v1922 = vadd.f32 %v1890, %v1914
        %v1923 = vrot.slane %v1883, 7
        %v1924 = vrot.slane %v1884, 7
        %v1925 = vrot.slane %v1885, 7
        %v1926 = vrot.slane %v1886, 7
        %v1927 = vrot.slane %v1887, 7
        %v1928 = vrot.slane %v1888, 7
        %v1929 = vrot.slane %v1889, 7
        %v1930 = vrot.slane %v1890, 7
        %v1931 = vsel %vm520, %v1929, %v1930
        %v1932 = vsel %vm520, %v1928, %v1929
        %v1933 = vsel %vm520, %v1927, %v1928
        %v1934 = vsel %vm520, %v1926, %v1927
        %v1935 = vsel %vm520, %v1925, %v1926
        %v1936 = vsel %vm520, %v1924, %v1925
        %v1937 = vsel %vm520, %v1923, %v1924
        %v1938 = vsel %vm520, %v1930, %v1923
        %v1939 = vmul.f32 %v465, %v1938
        %v1940 = vmul.f32 %v466, %v1937
        %v1941 = vmul.f32 %v465, %v1936
        %v1942 = vmul.f32 %v466, %v1935
        %v1943 = vmul.f32 %v465, %v1934
        %v1944 = vmul.f32 %v466, %v1933
        %v1945 = vmul.f32 %v465, %v1932
        %v1946 = vmul.f32 %v466, %v1931
        %v1947 = vadd.f32 %v1915, %v1939
        %v1948 = vadd.f32 %v1916, %v1940
        %v1949 = vadd.f32 %v1917, %v1941
        %v1950 = vadd.f32 %v1918, %v1942
        %v1951 = vadd.f32 %v1919, %v1943
        %v1952 = vadd.f32 %v1920, %v1944
        %v1953 = vadd.f32 %v1921, %v1945
        %v1954 = vadd.f32 %v1922, %v1946
        %v1955 = vrot.slane %v1883, 2
        %v1956 = vrot.slane %v1884, 2
        %v1957 = vrot.slane %v1885, 2
        %v1958 = vrot.slane %v1886, 2
        %v1959 = vrot.slane %v1887, 2
        %v1960 = vrot.slane %v1888, 2
        %v1961 = vrot.slane %v1889, 2
        %v1962 = vrot.slane %v1890, 2
        %v1963 = vsel %vm553, %v1961, %v1962
        %v1964 = vsel %vm553, %v1960, %v1961
        %v1965 = vsel %vm553, %v1959, %v1960
        %v1966 = vsel %vm553, %v1958, %v1959
        %v1967 = vsel %vm553, %v1957, %v1958
        %v1968 = vsel %vm553, %v1956, %v1957
        %v1969 = vsel %vm553, %v1955, %v1956
        %v1970 = vsel %vm553, %v1962, %v1955
        %v1971 = vmul.f32 %v473, %v1969
        %v1972 = vmul.f32 %v474, %v1968
        %v1973 = vmul.f32 %v473, %v1967
        %v1974 = vmul.f32 %v474, %v1966
        %v1975 = vmul.f32 %v473, %v1965
        %v1976 = vmul.f32 %v474, %v1964
        %v1977 = vmul.f32 %v473, %v1963
        %v1978 = vmul.f32 %v474, %v1970
        %v1979 = vadd.f32 %v1947, %v1971
        %v1980 = vadd.f32 %v1948, %v1972
        %v1981 = vadd.f32 %v1949, %v1973
        %v1982 = vadd.f32 %v1950, %v1974
        %v1983 = vadd.f32 %v1951, %v1975
        %v1984 = vadd.f32 %v1952, %v1976
        %v1985 = vadd.f32 %v1953, %v1977
        %v1986 = vadd.f32 %v1954, %v1978
        %v1987 = vrot.slane %v1883, 6
        %v1988 = vrot.slane %v1884, 6
        %v1989 = vrot.slane %v1885, 6
        %v1990 = vrot.slane %v1886, 6
        %v1991 = vrot.slane %v1887, 6
        %v1992 = vrot.slane %v1888, 6
        %v1993 = vrot.slane %v1889, 6
        %v1994 = vrot.slane %v1890, 6
        %v1995 = vsel %vm586, %v1993, %v1994
        %v1996 = vsel %vm586, %v1992, %v1993
        %v1997 = vsel %vm586, %v1991, %v1992
        %v1998 = vsel %vm586, %v1990, %v1991
        %v1999 = vsel %vm586, %v1989, %v1990
        %v2000 = vsel %vm586, %v1988, %v1989
        %v2001 = vsel %vm586, %v1987, %v1988
        %v2002 = vsel %vm586, %v1994, %v1987
        %v2003 = vmul.f32 %v477, %v2002
        %v2004 = vmul.f32 %v478, %v2001
        %v2005 = vmul.f32 %v477, %v2000
        %v2006 = vmul.f32 %v478, %v1999
        %v2007 = vmul.f32 %v477, %v1998
        %v2008 = vmul.f32 %v478, %v1997
        %v2009 = vmul.f32 %v477, %v1996
        %v2010 = vmul.f32 %v478, %v1995
        %v2011 = vadd.f32 %v1979, %v2003
        %v2012 = vadd.f32 %v1980, %v2004
        %v2013 = vadd.f32 %v1981, %v2005
        %v2014 = vadd.f32 %v1982, %v2006
        %v2015 = vadd.f32 %v1983, %v2007
        %v2016 = vadd.f32 %v1984, %v2008
        %v2017 = vadd.f32 %v1985, %v2009
        %v2018 = vadd.f32 %v1986, %v2010
        %v2019 = vmul.f32 %v1755, %v292
        %v2020 = vmul.f32 %v1756, %v293
        %v2021 = vmul.f32 %v1757, %v292
        %v2022 = vmul.f32 %v1758, %v293
        %v2023 = vmul.f32 %v1759, %v292
        %v2024 = vmul.f32 %v1760, %v293
        %v2025 = vmul.f32 %v1761, %v292
        %v2026 = vmul.f32 %v1762, %v293
        %v2027 = vmul.f32 %v2019, %v276
        %v2028 = vmul.f32 %v2020, %v277
        %v2029 = vmul.f32 %v2021, %v278
        %v2030 = vmul.f32 %v2022, %v279
        %v2031 = vmul.f32 %v2023, %v280
        %v2032 = vmul.f32 %v2024, %v281
        %v2033 = vmul.f32 %v2025, %v282
        %v2034 = vmul.f32 %v2026, %v283
        %v2035 = vmul.f32 %v2011, %v292
        %v2036 = vmul.f32 %v2012, %v293
        %v2037 = vmul.f32 %v2013, %v292
        %v2038 = vmul.f32 %v2014, %v293
        %v2039 = vmul.f32 %v2015, %v292
        %v2040 = vmul.f32 %v2016, %v293
        %v2041 = vmul.f32 %v2017, %v292
        %v2042 = vmul.f32 %v2018, %v293
        %v2043 = vadd.f32 %v2027, %v2035
        %v2044 = vadd.f32 %v2028, %v2036
        %v2045 = vadd.f32 %v2029, %v2037
        %v2046 = vadd.f32 %v2030, %v2038
        %v2047 = vadd.f32 %v2031, %v2039
        %v2048 = vadd.f32 %v2032, %v2040
        %v2049 = vadd.f32 %v2033, %v2041
        %v2050 = vadd.f32 %v2034, %v2042
        %2051 = vst [vmem:[%s272] sm:$0xff] %v2043
        %2052 = vst [vmem:[%s272 + $0x8] sm:$0xff] %v2044
        %2053 = vst [vmem:[%s272 + $0x10] sm:$0xff] %v2045
        %2054 = vst [vmem:[%s272 + $0x18] sm:$0xff] %v2046
        %2055 = vst [vmem:[%s272 + $0x20] sm:$0xff] %v2047
        %2056 = vst [vmem:[%s272 + $0x28] sm:$0xff] %v2048
        %2057 = vst [vmem:[%s272 + $0x30] sm:$0xff] %v2049
        %2058 = vst [vmem:[%s272 + $0x38] sm:$0xff] %v2050
        %s2059 = sand.u32 %s122, 1
        %s2060 = scalar_lea.sflag [#allocation4], %s2059
        %s2061 = sand.u32 %s122, 1
        %s2062 = smul.addr %s2061, 64
        %s2063 = scalar_lea.vmem [#allocation8], %s2062
        // Predicated region
        $region45: #{tpu_custom_call.1} parent=31 // pred_check
          %p2064 = pneg %p132
        $region46: #{tpu_custom_call.1} parent=31 // pred_check_branch
          %2066 = sbr.rel (%p2064) target = $region48
        $region47: #{tpu_custom_call.1} parent=31 // pred_region
          %s2067 = smul.u32 4, %s28
          %2069 = vsyncadd %s2060, 0
          %s2070 = smul.addr %s2067, 2
          %s2071 = smul.addr %s27, 8
          %s2072 = sadd.s32 %s2070, %s2071
          %s2073 = smul.addr %s2072, 8
          %s2074 = scalar_lea.hbm %s3, %s2073
          %s2075 = sshll.u32 %s2063, 4
          %s2076 = int_to_ptr.vmem [resolvable:$true] %s2075
          %s2077 = sshll.u32 %s2074, 4
          %s2078 = int_to_ptr.hbm [resolvable:$true] %s2077
          %2083 = dma.vmem_to_hbm [thread:$0]  %s2076, 1024, %s2078, %s2060, 128, 128, 8
        $region48: #{tpu_custom_call.1} parent=31 // pred_fallthru
          _
      $region32: #{tpu_custom_call.1} parent=5 // pred_fallthru
        _
      %p2084 = scmp.le.s32.totalorder 2, %s18
      // Predicated region
      $region49: #{tpu_custom_call.1} parent=5 // pred_check
        %p2085 = pneg %p2084
      $region50: #{tpu_custom_call.1} parent=5 // pred_check_branch
        %2087 = sbr.rel (%p2085) target = $region52
      $region51: #{tpu_custom_call.1} parent=5 // pred_region
        %s2088 = ssub.s32 %s18, 2
        // Predicated region
        $region53: #{tpu_custom_call.1} parent=51 // pred_check
          %p2089 = pneg %p138
        $region54: #{tpu_custom_call.1} parent=51 // pred_check_branch
          %2091 = sbr.rel (%p2089) target = $region56
        $region55: #{tpu_custom_call.1} parent=51 // pred_region
          %s2092 = sand.u32 %s123, 1
          %s2093 = scalar_lea.sflag [#allocation4], %s2092
          %s2094 = sand.u32 %s123, 1
          %s2095 = smul.addr %s2094, 64
          %s2096 = scalar_lea.vmem [#allocation8], %s2095
          %2098 = dma.done %s2093, 1024
        $region56: #{tpu_custom_call.1} parent=51 // pred_fallthru
          _
      $region52: #{tpu_custom_call.1} parent=5 // pred_fallthru
        _
    $region6: #{tpu_custom_call.1} parent=1 // loop_footer
      %s22 = sadd.s32 1, %s18
    $region7: #{tpu_custom_call.1} parent=1 // loop_footer_branch
      %17 = sbr.rel target = $region3
    $region8: #{tpu_custom_call.1} parent=1 // loop_exit
      _
    %2099 = vsyncpa [#allocation3], 1
    %s2100 = scalar_lea.sflag [#allocation3], 1
    %2101 = vsyncpa %s2100, 1
    %2102 = vsyncpa [#allocation6], 1
    %s2103 = scalar_lea.sflag [#allocation6], 1
    %2104 = vsyncpa %s2103, 1
    %2105 = vsyncpa [#allocation4], 1
    %s2106 = scalar_lea.sflag [#allocation4], 1
    %2107 = vsyncpa %s2106, 1

</llo_original>
